<compile_context>
chip_gen: v7x
topology: tpu7x:2x2x1
jax: 0.10.0
libtpu: 0.0.40
codegen_flags: <defaults>
</compile_context>

<pallas_src>
import functools

import jax
import jax.numpy as jnp
from jax.experimental import pallas as pl
from jax.experimental.pallas import tpu as pltpu

EPS = 1e-4
LANE = 128
TILE_MAX = 2048                    # large row tile amortizes per-step overhead
VMEM_LIMIT = 48 * 1024 * 1024      # headroom under v7x's 64 MiB physical VMEM


def _round_up(x, m):
    return (x + m - 1) // m * m


def _fused_kernel(z_ref, z1_ref, z2_ref, ids_ref, nrm_ref,
                  w1_ref, b1_ref, w2_ref, b2_ref, out_ref,
                  *, tile, nb_pad):
    w1 = w1_ref[...]                       # bf16 (dz_pad, h_pad), resident
    b1 = b1_ref[...]                       # f32  (1, h_pad)
    w2 = w2_ref[...]                       # bf16 (h_pad, nb_pad), resident
    b2 = b2_ref[...]                       # f32  (1, nb_pad)

    def mlp(zz):                           # 2-layer MLP on the MXU, f32 accum
        h = jnp.dot(zz, w1, preferred_element_type=jnp.float32) + b1
        h = jnp.maximum(h, 0.0)
        return jnp.dot(h.astype(jnp.bfloat16), w2,
                       preferred_element_type=jnp.float32) + b2

    # Three direct dots against resident weights (no concat / VMEM copy).
    x = mlp(z_ref[...])                    # f(z)   (tile, nb_pad) f32
    f1 = mlp(z1_ref[...])                  # f(z1)
    f2 = mlp(z2_ref[...])                  # f(z2)

    bid = ids_ref[...]                     # (tile, 1) int32, -1 on padded rows
    lane = jax.lax.broadcasted_iota(jnp.int32, (tile, nb_pad), 1)
    oh = (lane == bid).astype(jnp.float32)        # one-hot; zero on padded rows
    valid = (bid >= 0).astype(jnp.float32)        # (tile, 1) row-validity mask

    # loss_fminf partial sums (per-batch-id column reductions).
    sum_in = jnp.sum(oh * x, axis=0, keepdims=True)            # (1, nb_pad)
    sum_all = jnp.sum(x * valid, axis=0, keepdims=True)        # (1, nb_pad)
    sum_out = sum_all - sum_in
    cnt = jnp.sum(oh, axis=0, keepdims=True)                   # (1, nb_pad)

    # Smoothness: |f1 - f2| / (eps + ||z1 - z2||), truncated x^2 - 1.
    # norm is precomputed in f32 in the wrapper; padded rows have z1==z2 and
    # norm==0, so r == 0 and they contribute exactly nothing.
    r = jnp.abs(f1 - f2) * pl.reciprocal(EPS + nrm_ref[...], approx=True)
    trunc = jnp.where(r <= 1.0, jnp.zeros_like(r), r * r - 1.0)
    tr_sum = jnp.sum(trunc, axis=0, keepdims=True)             # (1, nb_pad)

    out_ref[...] = jnp.concatenate(
        [sum_in, sum_out, cnt, tr_sum,
         jnp.zeros((4, nb_pad), jnp.float32)], axis=0)          # (8, nb_pad)


def fused_forward_stats(z_p, z1_p, z2_p, ids_p, nrm_p, params_p, *, tile):
    n_pad, dz_pad = z_p.shape
    h_pad = params_p["w1"].shape[1]
    nb_pad = params_p["w2"].shape[1]
    num_tiles = n_pad // tile

    flops = 2 * 3 * n_pad * (dz_pad * h_pad + h_pad * nb_pad)
    bytes_accessed = (3 * n_pad * dz_pad * 2            # bf16 z / z1 / z2
                      + n_pad * 4                       # int32 batch ids
                      + n_pad * 4                       # f32 ||z1 - z2||
                      + (dz_pad * h_pad + h_pad * nb_pad) * 2   # bf16 weights
                      + (h_pad + nb_pad) * 4                    # f32 biases
                      + num_tiles * 8 * nb_pad * 4)             # stats output
    cost = pl.CostEstimate(flops=flops, transcendentals=n_pad,
                           bytes_accessed=bytes_accessed)

    kernel = functools.partial(_fused_kernel, tile=tile, nb_pad=nb_pad)

    out = pl.pallas_call(
        kernel,
        out_shape=jax.ShapeDtypeStruct((num_tiles * 8, nb_pad), jnp.float32),
        grid=(num_tiles,),
        in_specs=[
            pl.BlockSpec((tile, dz_pad), lambda i: (i, 0)),    # z  (bf16)
            pl.BlockSpec((tile, dz_pad), lambda i: (i, 0)),    # z1 (bf16)
            pl.BlockSpec((tile, dz_pad), lambda i: (i, 0)),    # z2 (bf16)
            pl.BlockSpec((tile, 1), lambda i: (i, 0)),         # batch ids (i32)
            pl.BlockSpec((tile, 1), lambda i: (i, 0)),         # ||z1-z2|| (f32)
            pl.BlockSpec((dz_pad, h_pad), lambda i: (0, 0)),   # w1 (resident)
            pl.BlockSpec((1, h_pad), lambda i: (0, 0)),        # b1
            pl.BlockSpec((h_pad, nb_pad), lambda i: (0, 0)),   # w2 (resident)
            pl.BlockSpec((1, nb_pad), lambda i: (0, 0)),       # b2
        ],
        out_specs=pl.BlockSpec((8, nb_pad), lambda i: (i, 0)),
        compiler_params=pltpu.CompilerParams(
            dimension_semantics=("parallel",),
            vmem_limit_bytes=VMEM_LIMIT),
        cost_estimate=cost,
    )(z_p, z1_p, z2_p, ids_p, nrm_p,
      params_p["w1"], params_p["b1"], params_p["w2"], params_p["b2"])

    return out.reshape(num_tiles, 8, nb_pad).sum(axis=0)       # (8, nb_pad)


def init_predictor_params(key, dim_z, hidden, num_batches):
    k1, k2, k3, k4 = jax.random.split(key, 4)
    return {
        "w1": jax.random.normal(k1, (dim_z, hidden), jnp.float32)
              / jnp.sqrt(jnp.float32(dim_z)),
        "b1": jax.random.normal(k2, (1, hidden), jnp.float32) * 0.01,
        "w2": jax.random.normal(k3, (hidden, num_batches), jnp.float32)
              / jnp.sqrt(jnp.float32(hidden)),
        "b2": jax.random.normal(k4, (1, num_batches), jnp.float32) * 0.01,
    }


def _pad2(a, rows, cols, dtype=None, value=0):
    r, c = a.shape
    out = jnp.pad(a, ((0, rows - r), (0, cols - c)), constant_values=value)
    return out.astype(dtype) if dtype is not None else out


def wass_dist_batchid_forward(rng_key, z, ten_batchid, params,
                              coef_fminf, coef_smoothness):
    """Mirrors WassDistBatchID.forward (predictor modeled as 2-layer MLP)."""
    n, dim_z = z.shape
    num_batches = ten_batchid.shape[1]
    hidden = params["w1"].shape[1]

    # Random permutations / uniform scale for _smoothnessloss_leibcont
    # (np.random / torch.rand in the reference -> jax.random here).
    k1, k2, k3, k4, k5 = jax.random.split(rng_key, 5)
    perm_a = jax.random.permutation(k1, n)
    perm_b = jax.random.permutation(k2, n)
    u = jax.random.uniform(k3, (n, 1), jnp.float32)
    z_init = z[perm_a] + u * z[perm_b]
    z1 = z_init[jax.random.permutation(k4, n)]
    z2 = z_init[jax.random.permutation(k5, n)]
    # f32 smoothness denominator computed BEFORE the bf16 downcast.
    nrm = jnp.sqrt(jnp.sum((z1 - z2) ** 2, axis=1, keepdims=True))   # (n, 1)
    # TODO(synk): fold the z1/z2 row gathers into the kernel with
    # PrefetchScalarGridSpec + batched make_async_copy to save one HBM pass.

    # int32 per-row batch ids replace the f32 one-hot (4 B/row vs 4*nb B/row).
    bids = jnp.argmax(ten_batchid, axis=1).astype(jnp.int32)[:, None]  # (n, 1)

    dz_pad = _round_up(dim_z, LANE)
    h_pad = _round_up(hidden, LANE)
    nb_pad = _round_up(num_batches, LANE)
    n_pad = _round_up(n, LANE)
    tile = min(TILE_MAX, n_pad)
    if n_pad > LANE and n_pad // tile < 2:
        # keep >= 2 grid steps so both v7x TensorCores get work
        tile = max(LANE, _round_up(n_pad // 2, LANE))
    n_pad = _round_up(n_pad, tile)

    z_p = _pad2(z, n_pad, dz_pad, jnp.bfloat16)
    z1_p = _pad2(z1, n_pad, dz_pad, jnp.bfloat16)
    z2_p = _pad2(z2, n_pad, dz_pad, jnp.bfloat16)
    ids_p = _pad2(bids, n_pad, 1, jnp.int32, value=-1)   # padded rows -> -1
    nrm_p = _pad2(nrm, n_pad, 1)
    params_p = {
        "w1": _pad2(params["w1"], dz_pad, h_pad, jnp.bfloat16),
        "b1": _pad2(params["b1"], 1, h_pad),
        "w2": _pad2(params["w2"], h_pad, nb_pad, jnp.bfloat16),
        "b2": _pad2(params["b2"], 1, nb_pad),
    }

    stats = fused_forward_stats(z_p, z1_p, z2_p, ids_p, nrm_p, params_p,
                                tile=tile)

    sum_in = stats[0, :num_batches]
    sum_out = stats[1, :num_batches]
    cnt = stats[2, :num_batches]
    smooth_total = jnp.sum(stats[3])

    nf = jnp.float32(n)
    mean_in = sum_in / jnp.maximum(cnt, 1.0)
    mean_out = sum_out / jnp.maximum(nf - cnt, 1.0)
    cand = mean_in - mean_out
    has_member = cnt >= 1.0
    # PyTorch semantics: the *last* bid with >=1 member overwrites `loss`,
    # and loss stays 0 unless more than one distinct batch id is present.
    last_bid = jnp.max(jnp.where(has_member, jnp.arange(num_batches), -1))
    num_distinct = jnp.sum(has_member.astype(jnp.int32))
    loss_fminf = jnp.where(num_distinct > 1,
                           jnp.take(cand, jnp.maximum(last_bid, 0)),
                           jnp.float32(0.0))

    loss_smoothness = smooth_total / nf   # mean over rows of sum over columns

    return {
        "loss_fminf": {"val": loss_fminf, "coef": coef_fminf},
        "loss_smoothness": {"val": loss_smoothness, "coef": coef_smoothness},
    }


if __name__ == "__main__":
    N = 8
    DIM_Z = 32
    HIDDEN = 32
    NUM_BATCHES = 4
    COEF_FMINF = 1.0
    COEF_SMOOTHNESS = 0.5

    root = jax.random.PRNGKey(0)
    k_z, k_bid, k_params, k_fwd = jax.random.split(root, 4)

    z = jax.random.normal(k_z, (N, DIM_Z), jnp.float32)
    bids = jax.random.randint(k_bid, (N,), 0, NUM_BATCHES)
    ten_batchid = jax.nn.one_hot(bids, NUM_BATCHES, dtype=jnp.float32)

    params = init_predictor_params(k_params, DIM_Z, HIDDEN, NUM_BATCHES)

    out = wass_dist_batchid_forward(
        k_fwd, z, ten_batchid, params, COEF_FMINF, COEF_SMOOTHNESS)
    jax.block_until_ready(out["loss_fminf"]["val"])
    jax.block_until_ready(out["loss_smoothness"]["val"])
    print("KERNEL_OK")
</pallas_src>

<mosaic_0001>
module attributes {stable_mosaic.version = 11 : i64} {
  func.func @_fused_kernel(%arg0: i32, %arg1: memref<128x128xbf16, #tpu.memory_space<vmem>>, %arg2: memref<128x128xbf16, #tpu.memory_space<vmem>>, %arg3: memref<128x128xbf16, #tpu.memory_space<vmem>>, %arg4: memref<128x1xi32, #tpu.memory_space<vmem>>, %arg5: memref<128x1xf32, #tpu.memory_space<vmem>>, %arg6: memref<128x128xbf16, #tpu.memory_space<vmem>>, %arg7: memref<1x128xf32, #tpu.memory_space<vmem>>, %arg8: memref<128x128xbf16, #tpu.memory_space<vmem>>, %arg9: memref<1x128xf32, #tpu.memory_space<vmem>>, %arg10: memref<8x128xf32, #tpu.memory_space<vmem>>) attributes {dimension_semantics = [#tpu.dimension_semantics<parallel>], iteration_bounds = array<i64: 1>, scalar_prefetch = 0 : i64, scratch_operands = 0 : i64, tpu.core_type = #tpu.core_type<tc>, window_params = [{transform_indices = @transform_0, window_bounds = array<i64: 128, 128>}, {transform_indices = @transform_1, window_bounds = array<i64: 128, 128>}, {transform_indices = @transform_2, window_bounds = array<i64: 128, 128>}, {transform_indices = @transform_3, window_bounds = array<i64: 128, 1>}, {transform_indices = @transform_4, window_bounds = array<i64: 128, 1>}, {pipeline_mode = #tpu.pipeline_mode<synchronous>, transform_indices = @transform_5, window_bounds = array<i64: 128, 128>}, {pipeline_mode = #tpu.pipeline_mode<synchronous>, transform_indices = @transform_6, window_bounds = array<i64: 1, 128>}, {pipeline_mode = #tpu.pipeline_mode<synchronous>, transform_indices = @transform_7, window_bounds = array<i64: 128, 128>}, {pipeline_mode = #tpu.pipeline_mode<synchronous>, transform_indices = @transform_8, window_bounds = array<i64: 1, 128>}, {transform_indices = @transform_9, window_bounds = array<i64: 8, 128>}]} {
    %c0 = arith.constant 0 : index
    %c0_0 = arith.constant 0 : index
    %0 = vector.load %arg6[%c0, %c0_0] : memref<128x128xbf16, #tpu.memory_space<vmem>>, vector<128x128xbf16>
    %c0_1 = arith.constant 0 : index
    %c0_2 = arith.constant 0 : index
    %1 = vector.load %arg7[%c0_1, %c0_2] : memref<1x128xf32, #tpu.memory_space<vmem>>, vector<1x128xf32>
    %c0_3 = arith.constant 0 : index
    %c0_4 = arith.constant 0 : index
    %2 = vector.load %arg8[%c0_3, %c0_4] : memref<128x128xbf16, #tpu.memory_space<vmem>>, vector<128x128xbf16>
    %c0_5 = arith.constant 0 : index
    %c0_6 = arith.constant 0 : index
    %3 = vector.load %arg9[%c0_5, %c0_6] : memref<1x128xf32, #tpu.memory_space<vmem>>, vector<1x128xf32>
    %c0_7 = arith.constant 0 : index
    %c0_8 = arith.constant 0 : index
    %4 = vector.load %arg1[%c0_7, %c0_8] : memref<128x128xbf16, #tpu.memory_space<vmem>>, vector<128x128xbf16>
    %cst = arith.constant dense<0.000000e+00> : vector<128x128xf32>
    %5 = tpu.matmul %4, %0, %cst {dimension_numbers = #tpu.dot_dimension_numbers<[1], [0], [0], [1], [0, 0, 1, 1], [], []>} : vector<128x128xbf16>, vector<128x128xbf16>, vector<128x128xf32> -> vector<128x128xf32>
    %6 = vector.broadcast %1 : vector<1x128xf32> to vector<128x128xf32>
    %7 = arith.addf %5, %6 : vector<128x128xf32>
    %cst_9 = arith.constant 0.000000e+00 : f32
    %8 = vector.broadcast %cst_9 : f32 to vector<128x128xf32>
    %9 = arith.maximumf %7, %8 : vector<128x128xf32>
    %10 = arith.truncf %9 : vector<128x128xf32> to vector<128x128xbf16>
    %cst_10 = arith.constant dense<0.000000e+00> : vector<128x128xf32>
    %11 = tpu.matmul %10, %2, %cst_10 {dimension_numbers = #tpu.dot_dimension_numbers<[1], [0], [0], [1], [0, 0, 1, 1], [], []>} : vector<128x128xbf16>, vector<128x128xbf16>, vector<128x128xf32> -> vector<128x128xf32>
    %12 = vector.broadcast %3 : vector<1x128xf32> to vector<128x128xf32>
    %13 = arith.addf %11, %12 : vector<128x128xf32>
    %c0_11 = arith.constant 0 : index
    %c0_12 = arith.constant 0 : index
    %14 = vector.load %arg2[%c0_11, %c0_12] : memref<128x128xbf16, #tpu.memory_space<vmem>>, vector<128x128xbf16>
    %cst_13 = arith.constant dense<0.000000e+00> : vector<128x128xf32>
    %15 = tpu.matmul %14, %0, %cst_13 {dimension_numbers = #tpu.dot_dimension_numbers<[1], [0], [0], [1], [0, 0, 1, 1], [], []>} : vector<128x128xbf16>, vector<128x128xbf16>, vector<128x128xf32> -> vector<128x128xf32>
    %16 = vector.broadcast %1 : vector<1x128xf32> to vector<128x128xf32>
    %17 = arith.addf %15, %16 : vector<128x128xf32>
    %cst_14 = arith.constant 0.000000e+00 : f32
    %18 = vector.broadcast %cst_14 : f32 to vector<128x128xf32>
    %19 = arith.maximumf %17, %18 : vector<128x128xf32>
    %20 = arith.truncf %19 : vector<128x128xf32> to vector<128x128xbf16>
    %cst_15 = arith.constant dense<0.000000e+00> : vector<128x128xf32>
    %21 = tpu.matmul %20, %2, %cst_15 {dimension_numbers = #tpu.dot_dimension_numbers<[1], [0], [0], [1], [0, 0, 1, 1], [], []>} : vector<128x128xbf16>, vector<128x128xbf16>, vector<128x128xf32> -> vector<128x128xf32>
    %22 = vector.broadcast %3 : vector<1x128xf32> to vector<128x128xf32>
    %23 = arith.addf %21, %22 : vector<128x128xf32>
    %c0_16 = arith.constant 0 : index
    %c0_17 = arith.constant 0 : index
    %24 = vector.load %arg3[%c0_16, %c0_17] : memref<128x128xbf16, #tpu.memory_space<vmem>>, vector<128x128xbf16>
    %cst_18 = arith.constant dense<0.000000e+00> : vector<128x128xf32>
    %25 = tpu.matmul %24, %0, %cst_18 {dimension_numbers = #tpu.dot_dimension_numbers<[1], [0], [0], [1], [0, 0, 1, 1], [], []>} : vector<128x128xbf16>, vector<128x128xbf16>, vector<128x128xf32> -> vector<128x128xf32>
    %26 = vector.broadcast %1 : vector<1x128xf32> to vector<128x128xf32>
    %27 = arith.addf %25, %26 : vector<128x128xf32>
    %cst_19 = arith.constant 0.000000e+00 : f32
    %28 = vector.broadcast %cst_19 : f32 to vector<128x128xf32>
    %29 = arith.maximumf %27, %28 : vector<128x128xf32>
    %30 = arith.truncf %29 : vector<128x128xf32> to vector<128x128xbf16>
    %cst_20 = arith.constant dense<0.000000e+00> : vector<128x128xf32>
    %31 = tpu.matmul %30, %2, %cst_20 {dimension_numbers = #tpu.dot_dimension_numbers<[1], [0], [0], [1], [0, 0, 1, 1], [], []>} : vector<128x128xbf16>, vector<128x128xbf16>, vector<128x128xf32> -> vector<128x128xf32>
    %32 = vector.broadcast %3 : vector<1x128xf32> to vector<128x128xf32>
    %33 = arith.addf %31, %32 : vector<128x128xf32>
    %c0_21 = arith.constant 0 : index
    %c0_22 = arith.constant 0 : index
    %34 = vector.load %arg4[%c0_21, %c0_22] : memref<128x1xi32, #tpu.memory_space<vmem>>, vector<128x1xi32>
    %35 = tpu.iota {dimensions = array<i32: 1>} : vector<128x128xi32>
    %36 = vector.broadcast %34 : vector<128x1xi32> to vector<128x128xi32>
    %37 = arith.cmpi eq, %35, %36 : vector<128x128xi32>
    %38 = arith.extui %37 : vector<128x128xi1> to vector<128x128xi32>
    %39 = arith.sitofp %38 : vector<128x128xi32> to vector<128x128xf32>
    %c0_i32 = arith.constant 0 : i32
    %40 = vector.broadcast %c0_i32 : i32 to vector<128x1xi32>
    %41 = arith.cmpi sge, %34, %40 : vector<128x1xi32>
    %42 = arith.extui %41 : vector<128x1xi1> to vector<128x1xi32>
    %43 = arith.sitofp %42 : vector<128x1xi32> to vector<128x1xf32>
    %44 = arith.mulf %39, %13 : vector<128x128xf32>
    %cst_23 = arith.constant dense<0.000000e+00> : vector<128xf32>
    %45 = vector.multi_reduction <add>, %44, %cst_23 [0] : vector<128x128xf32> to vector<128xf32>
    %46 = vector.shape_cast %45 : vector<128xf32> to vector<1x128xf32>
    %47 = vector.broadcast %43 : vector<128x1xf32> to vector<128x128xf32>
    %48 = arith.mulf %13, %47 : vector<128x128xf32>
    %cst_24 = arith.constant dense<0.000000e+00> : vector<128xf32>
    %49 = vector.multi_reduction <add>, %48, %cst_24 [0] : vector<128x128xf32> to vector<128xf32>
    %50 = vector.shape_cast %49 : vector<128xf32> to vector<1x128xf32>
    %51 = arith.subf %50, %46 : vector<1x128xf32>
    %cst_25 = arith.constant dense<0.000000e+00> : vector<128xf32>
    %52 = vector.multi_reduction <add>, %39, %cst_25 [0] : vector<128x128xf32> to vector<128xf32>
    %53 = vector.shape_cast %52 : vector<128xf32> to vector<1x128xf32>
    %54 = arith.subf %23, %33 : vector<128x128xf32>
    %55 = math.absf %54 : vector<128x128xf32>
    %c0_26 = arith.constant 0 : index
    %c0_27 = arith.constant 0 : index
    %56 = vector.load %arg5[%c0_26, %c0_27] : memref<128x1xf32, #tpu.memory_space<vmem>>, vector<128x1xf32>
    %cst_28 = arith.constant 9.99999974E-5 : f32
    %57 = vector.broadcast %cst_28 : f32 to vector<128x1xf32>
    %58 = arith.addf %57, %56 : vector<128x1xf32>
    %59 = tpu.reciprocal %58 {approx = true} : vector<128x1xf32> -> vector<128x1xf32>
    %60 = vector.broadcast %59 : vector<128x1xf32> to vector<128x128xf32>
    %61 = arith.mulf %55, %60 : vector<128x128xf32>
    %cst_29 = arith.constant 1.000000e+00 : f32
    %62 = vector.broadcast %cst_29 : f32 to vector<128x128xf32>
    %63 = arith.cmpf ole, %61, %62 : vector<128x128xf32>
    %cst_30 = arith.constant 0.000000e+00 : f32
    %64 = vector.broadcast %cst_30 : f32 to vector<128x128xf32>
    %65 = arith.mulf %61, %61 : vector<128x128xf32>
    %cst_31 = arith.constant 1.000000e+00 : f32
    %66 = vector.broadcast %cst_31 : f32 to vector<128x128xf32>
    %67 = arith.subf %65, %66 : vector<128x128xf32>
    %68 = arith.select %63, %64, %67 : vector<128x128xi1>, vector<128x128xf32>
    %cst_32 = arith.constant dense<0.000000e+00> : vector<128xf32>
    %69 = vector.multi_reduction <add>, %68, %cst_32 [0] : vector<128x128xf32> to vector<128xf32>
    %70 = vector.shape_cast %69 : vector<128xf32> to vector<1x128xf32>
    %cst_33 = arith.constant 0.000000e+00 : f32
    %71 = vector.broadcast %cst_33 : f32 to vector<4x128xf32>
    %72 = tpu.concatenate %46, %51, %53, %70, %71 in 0 : vector<1x128xf32>, vector<1x128xf32>, vector<1x128xf32>, vector<1x128xf32>, vector<4x128xf32> -> vector<8x128xf32>
    %c0_34 = arith.constant 0 : index
    %c0_35 = arith.constant 0 : index
    %73 = vector.load %arg10[%c0_34, %c0_35] : memref<8x128xf32, #tpu.memory_space<vmem>>, vector<8x128xf32>
    tpu.vector_store %arg10[%c0_34, %c0_35], %72 {strides = array<i32>} : memref<8x128xf32, #tpu.memory_space<vmem>>, vector<8x128xf32>,
    return
  }
  func.func @transform_0(%arg0: i32) -> (i32, i32) {
    %c0_i32 = arith.constant 0 : i32
    %c0_i32_0 = arith.constant 0 : i32
    return %arg0, %c0_i32 : i32, i32
  }
  func.func @transform_1(%arg0: i32) -> (i32, i32) {
    %c0_i32 = arith.constant 0 : i32
    %c0_i32_0 = arith.constant 0 : i32
    return %arg0, %c0_i32 : i32, i32
  }
  func.func @transform_2(%arg0: i32) -> (i32, i32) {
    %c0_i32 = arith.constant 0 : i32
    %c0_i32_0 = arith.constant 0 : i32
    return %arg0, %c0_i32 : i32, i32
  }
  func.func @transform_3(%arg0: i32) -> (i32, i32) {
    %c0_i32 = arith.constant 0 : i32
    %c0_i32_0 = arith.constant 0 : i32
    return %arg0, %c0_i32 : i32, i32
  }
  func.func @transform_4(%arg0: i32) -> (i32, i32) {
    %c0_i32 = arith.constant 0 : i32
    %c0_i32_0 = arith.constant 0 : i32
    return %arg0, %c0_i32 : i32, i32
  }
  func.func @transform_5(%arg0: i32) -> (i32, i32) {
    %c0_i32 = arith.constant 0 : i32
    %c0_i32_0 = arith.constant 0 : i32
    %c0_i32_1 = arith.constant 0 : i32
    return %c0_i32, %c0_i32_0 : i32, i32
  }
  func.func @transform_6(%arg0: i32) -> (i32, i32) {
    %c0_i32 = arith.constant 0 : i32
    %c0_i32_0 = arith.constant 0 : i32
    %c0_i32_1 = arith.constant 0 : i32
    return %c0_i32, %c0_i32_0 : i32, i32
  }
  func.func @transform_7(%arg0: i32) -> (i32, i32) {
    %c0_i32 = arith.constant 0 : i32
    %c0_i32_0 = arith.constant 0 : i32
    %c0_i32_1 = arith.constant 0 : i32
    return %c0_i32, %c0_i32_0 : i32, i32
  }
  func.func @transform_8(%arg0: i32) -> (i32, i32) {
    %c0_i32 = arith.constant 0 : i32
    %c0_i32_0 = arith.constant 0 : i32
    %c0_i32_1 = arith.constant 0 : i32
    return %c0_i32, %c0_i32_0 : i32, i32
  }
  func.func @transform_9(%arg0: i32) -> (i32, i32) {
    %c0_i32 = arith.constant 0 : i32
    %c0_i32_0 = arith.constant 0 : i32
    return %arg0, %c0_i32 : i32, i32
  }
}

</mosaic_0001>

<llo_original>
// kernel: tpu_custom_call.1
$region0: #{tpu_custom_call.1}
  #allocation0 [shape = 'u32[]', space=smem, size = 0x4, offset = 0x4, fixed_abs, tag = 'smem constant byte address 0x4 - core index']
  #allocation1 [shape = 'u32[144,128]{1,0:T(1,128)}', space=vmem, size = 0x12000, scoped, tag = 'internal scratch']
  %s0 = inlined_call_operand.vmem [shape: bf16[128,128], index: 0, kind: input, shape index: {}]
  %s1 = inlined_call_operand.vmem [shape: bf16[128,128], index: 1, kind: input, shape index: {}]
  %s2 = inlined_call_operand.vmem [shape: bf16[128,128], index: 2, kind: input, shape index: {}]
  %s3 = inlined_call_operand.vmem [shape: s32[128,1], index: 3, kind: input, shape index: {}]
  %s4 = inlined_call_operand.vmem [shape: f32[128,1], index: 4, kind: input, shape index: {}]
  %s5 = inlined_call_operand.vmem [shape: bf16[128,128], index: 5, kind: input, shape index: {}]
  %s6 = inlined_call_operand.vmem [shape: f32[1,128], index: 6, kind: input, shape index: {}]
  %s7 = inlined_call_operand.hbm [shape: bf16[128,128], index: 7, kind: input, shape index: {}]
  %s8 = inlined_call_operand.vmem [shape: f32[1,128], index: 8, kind: input, shape index: {}]
  %s9 = inlined_call_operand.hbm [shape: f32[8,128], index: 9, kind: output, shape index: {}]
  %s10 = sld [smem:[#allocation0]]
  $region50: #{tpu_custom_call.1} parent=0
    _
  %s12 = ssub.s32 1, %s10
  %s13 = scalar_select 0, %s12, %s10
  $region1: #{tpu_custom_call.1} parent=0
    #allocation2 [shape = 'u8[32768]{0}', space=vmem, size = 0x8000, scoped, tag = 'input window, operand 7, single buffered']
    #allocation3 [shape = 's32[1]{0}', space=sflag, size = 0x4, scoped, tag = 'scoped memory for tpu_custom_call.1']
    #allocation4 [shape = 's32[1]{0}', space=sflag, size = 0x4, scoped, tag = 'scoped memory for tpu_custom_call.1']
    #allocation5 [shape = 'u8[4096]{0}', space=vmem, size = 0x1000, scoped, tag = 'output window, operand 0, single buffered']
    %14 = vsyncpa [#allocation3], 0
    %15 = vsyncpa [#allocation4], 0
    // Predicated region
    $region2: #{tpu_custom_call.1} parent=1 // pred_check
      _
    $region3: #{tpu_custom_call.1} parent=1 // pred_check_branch
      %17 = sbr.rel (0) target = $region5
    $region4: #{tpu_custom_call.1} parent=1 // pred_region
      _
    $region5: #{tpu_custom_call.1} parent=1 // pred_fallthru
      _
    // Predicated region
    $region6: #{tpu_custom_call.1} parent=1 // pred_check
      _
    $region7: #{tpu_custom_call.1} parent=1 // pred_check_branch
      %19 = sbr.rel (0) target = $region9
    $region8: #{tpu_custom_call.1} parent=1 // pred_region
      _
    $region9: #{tpu_custom_call.1} parent=1 // pred_fallthru
      _
    // Predicated region
    $region10: #{tpu_custom_call.1} parent=1 // pred_check
      _
    $region11: #{tpu_custom_call.1} parent=1 // pred_check_branch
      %21 = sbr.rel (0) target = $region13
    $region12: #{tpu_custom_call.1} parent=1 // pred_region
      _
    $region13: #{tpu_custom_call.1} parent=1 // pred_fallthru
      _
    // Predicated region
    $region14: #{tpu_custom_call.1} parent=1 // pred_check
      _
    $region15: #{tpu_custom_call.1} parent=1 // pred_check_branch
      %23 = sbr.rel (0) target = $region17
    $region16: #{tpu_custom_call.1} parent=1 // pred_region
      _
    $region17: #{tpu_custom_call.1} parent=1 // pred_fallthru
      _
    // Predicated region
    $region18: #{tpu_custom_call.1} parent=1 // pred_check
      _
    $region19: #{tpu_custom_call.1} parent=1 // pred_check_branch
      %25 = sbr.rel (0) target = $region21
    $region20: #{tpu_custom_call.1} parent=1 // pred_region
      _
    $region21: #{tpu_custom_call.1} parent=1 // pred_fallthru
      _
    // Predicated region
    $region22: #{tpu_custom_call.1} parent=1 // pred_check
      _
    $region23: #{tpu_custom_call.1} parent=1 // pred_check_branch
      %27 = sbr.rel (0) target = $region25
    $region24: #{tpu_custom_call.1} parent=1 // pred_region
      _
    $region25: #{tpu_custom_call.1} parent=1 // pred_fallthru
      _
    // Predicated region
    $region26: #{tpu_custom_call.1} parent=1 // pred_check
      _
    $region27: #{tpu_custom_call.1} parent=1 // pred_check_branch
      %29 = sbr.rel (0) target = $region29
    $region28: #{tpu_custom_call.1} parent=1 // pred_region
      _
    $region29: #{tpu_custom_call.1} parent=1 // pred_fallthru
      _
    // Predicated region
    $region30: #{tpu_custom_call.1} parent=1 // pred_check
      _
    $region31: #{tpu_custom_call.1} parent=1 // pred_check_branch
      %31 = sbr.rel (0) target = $region33
    $region32: #{tpu_custom_call.1} parent=1 // pred_region
      %s33 = ssub.s32 1024, 1024
      %34 = vsyncadd [#allocation3], %s33
      %s35 = sshll.u32 [#allocation2], 4
      %s36 = int_to_ptr.vmem [resolvable:$true] %s35
      %41 = dma.hbm_to_vmem [thread:$0]  %s7, 1024, %s36, [#allocation3], 64, 64, 4
    $region33: #{tpu_custom_call.1} parent=1 // pred_fallthru
      _
    // Predicated region
    $region34: #{tpu_custom_call.1} parent=1 // pred_check
      _
    $region35: #{tpu_custom_call.1} parent=1 // pred_check_branch
      %43 = sbr.rel (0) target = $region37
    $region36: #{tpu_custom_call.1} parent=1 // pred_region
      _
    $region37: #{tpu_custom_call.1} parent=1 // pred_fallthru
      _
    // Predicated region
    $region38: #{tpu_custom_call.1} parent=1 // pred_check
      _
    $region39: #{tpu_custom_call.1} parent=1 // pred_check_branch
      %45 = sbr.rel (0) target = $region41
    $region40: #{tpu_custom_call.1} parent=1 // pred_region
      %46 = dma.done [#allocation3], 1024
    $region41: #{tpu_custom_call.1} parent=1 // pred_fallthru
      _
    %v48 = vld [vmem:[%s5] sm:$0xf]
    %v49 = vld [vmem:[%s5 + $0x4] sm:$0xf]
    %v50 = vld [vmem:[%s5 + $0x8] sm:$0xf]
    %v51 = vld [vmem:[%s5 + $0xc] sm:$0xf]
    %v52 = vld [vmem:[%s5 + $0x10] sm:$0xf]
    %v53 = vld [vmem:[%s5 + $0x14] sm:$0xf]
    %v54 = vld [vmem:[%s5 + $0x18] sm:$0xf]
    %v55 = vld [vmem:[%s5 + $0x1c] sm:$0xf]
    %v56 = vld [vmem:[%s5 + $0x20] sm:$0xf]
    %v57 = vld [vmem:[%s5 + $0x24] sm:$0xf]
    %v58 = vld [vmem:[%s5 + $0x28] sm:$0xf]
    %v59 = vld [vmem:[%s5 + $0x2c] sm:$0xf]
    %v60 = vld [vmem:[%s5 + $0x30] sm:$0xf]
    %v61 = vld [vmem:[%s5 + $0x34] sm:$0xf]
    %v62 = vld [vmem:[%s5 + $0x38] sm:$0xf]
    %v63 = vld [vmem:[%s5 + $0x3c] sm:$0xf]
    %v64 = vld [vmem:[%s6] sm:$0x1]
    %v65 = vld [vmem:[#allocation2] sm:$0xf]
    %v66 = vld [vmem:[#allocation2 + $0x4] sm:$0xf]
    %v67 = vld [vmem:[#allocation2 + $0x8] sm:$0xf]
    %v68 = vld [vmem:[#allocation2 + $0xc] sm:$0xf]
    %v69 = vld [vmem:[#allocation2 + $0x10] sm:$0xf]
    %v70 = vld [vmem:[#allocation2 + $0x14] sm:$0xf]
    %v71 = vld [vmem:[#allocation2 + $0x18] sm:$0xf]
    %v72 = vld [vmem:[#allocation2 + $0x1c] sm:$0xf]
    %v73 = vld [vmem:[#allocation2 + $0x20] sm:$0xf]
    %v74 = vld [vmem:[#allocation2 + $0x24] sm:$0xf]
    %v75 = vld [vmem:[#allocation2 + $0x28] sm:$0xf]
    %v76 = vld [vmem:[#allocation2 + $0x2c] sm:$0xf]
    %v77 = vld [vmem:[#allocation2 + $0x30] sm:$0xf]
    %v78 = vld [vmem:[#allocation2 + $0x34] sm:$0xf]
    %v79 = vld [vmem:[#allocation2 + $0x38] sm:$0xf]
    %v80 = vld [vmem:[#allocation2 + $0x3c] sm:$0xf]
    %v81 = vld [vmem:[%s8] sm:$0x1]
    %v82 = vld [vmem:[%s0] sm:$0xf]
    %v83 = vld [vmem:[%s0 + $0x4] sm:$0xf]
    %v84 = vld [vmem:[%s0 + $0x8] sm:$0xf]
    %v85 = vld [vmem:[%s0 + $0xc] sm:$0xf]
    %v86 = vld [vmem:[%s0 + $0x10] sm:$0xf]
    %v87 = vld [vmem:[%s0 + $0x14] sm:$0xf]
    %v88 = vld [vmem:[%s0 + $0x18] sm:$0xf]
    %v89 = vld [vmem:[%s0 + $0x1c] sm:$0xf]
    %v90 = vld [vmem:[%s0 + $0x20] sm:$0xf]
    %v91 = vld [vmem:[%s0 + $0x24] sm:$0xf]
    %v92 = vld [vmem:[%s0 + $0x28] sm:$0xf]
    %v93 = vld [vmem:[%s0 + $0x2c] sm:$0xf]
    %v94 = vld [vmem:[%s0 + $0x30] sm:$0xf]
    %v95 = vld [vmem:[%s0 + $0x34] sm:$0xf]
    %v96 = vld [vmem:[%s0 + $0x38] sm:$0xf]
    %v97 = vld [vmem:[%s0 + $0x3c] sm:$0xf]
    %v99 = vlaneseq
    %v100 = vshrl.u32 %v99, 7
    %v101 = vsub.s32 0, %v100
    %v102 = vrot.slane %v64, %v101
    %v120 = vunpack.c.l.b16 %v82
    %v121 = vunpack.c.l.b16 %v83
    %v122 = vunpack.c.l.b16 %v84
    %v123 = vunpack.c.l.b16 %v85
    %v124 = vunpack.c.l.b16 %v86
    %v125 = vunpack.c.l.b16 %v87
    %v126 = vunpack.c.l.b16 %v88
    %v127 = vunpack.c.l.b16 %v89
    %v128 = vunpack.c.l.b16 %v90
    %v129 = vunpack.c.l.b16 %v91
    %v130 = vunpack.c.l.b16 %v92
    %v131 = vunpack.c.l.b16 %v93
    %v132 = vunpack.c.l.b16 %v94
    %v133 = vunpack.c.l.b16 %v95
    %v134 = vunpack.c.l.b16 %v96
    %v135 = vunpack.c.l.b16 %v97
    %v136 = vpack.c.b16 %v121, %v120
    %v137 = vpack.c.b16 %v123, %v122
    %v138 = vpack.c.b16 %v125, %v124
    %v139 = vpack.c.b16 %v127, %v126
    %v140 = vpack.c.b16 %v129, %v128
    %v141 = vpack.c.b16 %v131, %v130
    %v142 = vpack.c.b16 %v133, %v132
    %v143 = vpack.c.b16 %v135, %v134
    %v168 = vunpack.c.l.b16 %v48
    %v169 = vunpack.c.l.b16 %v49
    %v170 = vunpack.c.l.b16 %v50
    %v171 = vunpack.c.l.b16 %v51
    %v172 = vunpack.c.l.b16 %v52
    %v173 = vunpack.c.l.b16 %v53
    %v174 = vunpack.c.l.b16 %v54
    %v175 = vunpack.c.l.b16 %v55
    %v176 = vunpack.c.l.b16 %v56
    %v177 = vunpack.c.l.b16 %v57
    %v178 = vunpack.c.l.b16 %v58
    %v179 = vunpack.c.l.b16 %v59
    %v180 = vunpack.c.l.b16 %v60
    %v181 = vunpack.c.l.b16 %v61
    %v182 = vunpack.c.l.b16 %v62
    %v183 = vunpack.c.l.b16 %v63
    %v184 = vpack.c.b16 %v169, %v168
    %v185 = vpack.c.b16 %v171, %v170
    %v186 = vpack.c.b16 %v173, %v172
    %v187 = vpack.c.b16 %v175, %v174
    %v188 = vpack.c.b16 %v177, %v176
    %v189 = vpack.c.b16 %v179, %v178
    %v190 = vpack.c.b16 %v181, %v180
    %v191 = vpack.c.b16 %v183, %v182
    %200 = vmatprep.subr.bf16.mxu0 0
    %201 = vmatpush1.bf16.msra.mxu0 %v184
    %202 = vmatprep.subr.bf16.mxu0 0
    %203 = vmatpush1.bf16.msra.mxu0 %v185
    %204 = vmatprep.subr.bf16.mxu0 0
    %205 = vmatpush1.bf16.msra.mxu0 %v186
    %206 = vmatprep.subr.bf16.mxu0 0
    %207 = vmatpush1.bf16.msra.mxu0 %v187
    %208 = vmatprep.subr.bf16.mxu0 0
    %209 = vmatpush1.bf16.msra.mxu0 %v188
    %210 = vmatprep.subr.bf16.mxu0 0
    %211 = vmatpush1.bf16.msra.mxu0 %v189
    %212 = vmatprep.subr.bf16.mxu0 0
    %213 = vmatpush1.bf16.msra.mxu0 %v190
    %214 = vmatprep.subr.bf16.mxu0 0
    %215 = vmatpush1.bf16.msra.mxu0 %v191
    %216 = vmatprep.subr.bf16.mxu0 0
    %217 = vmatpush1.bf16.msra.mxu0 0
    %218 = vmatprep.subr.bf16.mxu0 0
    %219 = vmatpush1.bf16.msra.mxu0 0
    %220 = vmatprep.subr.bf16.mxu0 0
    %221 = vmatpush1.bf16.msra.mxu0 0
    %222 = vmatprep.subr.bf16.mxu0 0
    %223 = vmatpush1.bf16.msra.mxu0 0
    %224 = vmatprep.subr.bf16.mxu0 0
    %225 = vmatpush1.bf16.msra.mxu0 0
    %226 = vmatprep.subr.bf16.mxu0 0
    %227 = vmatpush1.bf16.msra.mxu0 0
    %228 = vmatprep.subr.bf16.mxu0 0
    %229 = vmatpush1.bf16.msra.mxu0 0
    %230 = vmatprep.subr.bf16.mxu0 0
    %231 = vmatpush1.bf16.msra.mxu0 0
    %232 = vmatprep.mubr.bf16.mxu0 0
    %233 = vmatmul.mubr.bf16.gmra.mrb[0].mxu0 %v136
    %v234 = vpop.f32.mrb[0].mxu0
    %v235 = vadd.f32 %v102, %v234
    %v236 = vpop.f32.mrb[0].mxu0
    %v237 = vpop.f32.mrb[0].mxu0
    %v238 = vadd.f32 %v102, %v237
    %v239 = vpop.f32.mrb[0].mxu0
    %240 = vmatprep.mubr.bf16.mxu0 0
    %241 = vmatmul.mubr.bf16.gmra.mrb[0].mxu0 %v137
    %v242 = vpop.f32.mrb[0].mxu0
    %v243 = vadd.f32 %v102, %v242
    %v244 = vpop.f32.mrb[0].mxu0
    %v245 = vpop.f32.mrb[0].mxu0
    %v246 = vadd.f32 %v102, %v245
    %v247 = vpop.f32.mrb[0].mxu0
    %248 = vmatprep.mubr.bf16.mxu0 0
    %249 = vmatmul.mubr.bf16.gmra.mrb[0].mxu0 %v138
    %v250 = vpop.f32.mrb[0].mxu0
    %v251 = vadd.f32 %v102, %v250
    %v252 = vpop.f32.mrb[0].mxu0
    %v253 = vpop.f32.mrb[0].mxu0
    %v254 = vadd.f32 %v102, %v253
    %v255 = vpop.f32.mrb[0].mxu0
    %256 = vmatprep.mubr.bf16.mxu0 0
    %257 = vmatmul.mubr.bf16.gmra.mrb[0].mxu0 %v139
    %v258 = vpop.f32.mrb[0].mxu0
    %v259 = vadd.f32 %v102, %v258
    %v260 = vpop.f32.mrb[0].mxu0
    %v261 = vpop.f32.mrb[0].mxu0
    %v262 = vadd.f32 %v102, %v261
    %v263 = vpop.f32.mrb[0].mxu0
    %264 = vmatprep.mubr.bf16.mxu0 0
    %265 = vmatmul.mubr.bf16.gmra.mrb[0].mxu0 %v140
    %v266 = vpop.f32.mrb[0].mxu0
    %v267 = vadd.f32 %v102, %v266
    %v268 = vpop.f32.mrb[0].mxu0
    %v269 = vpop.f32.mrb[0].mxu0
    %v270 = vadd.f32 %v102, %v269
    %v271 = vpop.f32.mrb[0].mxu0
    %272 = vmatprep.mubr.bf16.mxu0 0
    %273 = vmatmul.mubr.bf16.gmra.mrb[0].mxu0 %v141
    %v274 = vpop.f32.mrb[0].mxu0
    %v275 = vadd.f32 %v102, %v274
    %v276 = vpop.f32.mrb[0].mxu0
    %v277 = vpop.f32.mrb[0].mxu0
    %v278 = vadd.f32 %v102, %v277
    %v279 = vpop.f32.mrb[0].mxu0
    %280 = vmatprep.mubr.bf16.mxu0 0
    %281 = vmatmul.mubr.bf16.gmra.mrb[0].mxu0 %v142
    %v282 = vpop.f32.mrb[0].mxu0
    %v283 = vadd.f32 %v102, %v282
    %v284 = vpop.f32.mrb[0].mxu0
    %v285 = vpop.f32.mrb[0].mxu0
    %v286 = vadd.f32 %v102, %v285
    %v287 = vpop.f32.mrb[0].mxu0
    %288 = vmatprep.mubr.bf16.mxu0 0
    %289 = vmatmul.mubr.bf16.gmra.mrb[0].mxu0 %v143
    %v290 = vpop.f32.mrb[0].mxu0
    %v291 = vadd.f32 %v102, %v290
    %v292 = vpop.f32.mrb[0].mxu0
    %v293 = vpop.f32.mrb[0].mxu0
    %v294 = vadd.f32 %v102, %v293
    %v295 = vpop.f32.mrb[0].mxu0
    %296 = vdwg.mxu0
    %v297 = vmax.f32 %v235, 0.0
    %v298 = vmax.f32 %v238, 0.0
    %v299 = vmax.f32 %v243, 0.0
    %v300 = vmax.f32 %v246, 0.0
    %v301 = vmax.f32 %v251, 0.0
    %v302 = vmax.f32 %v254, 0.0
    %v303 = vmax.f32 %v259, 0.0
    %v304 = vmax.f32 %v262, 0.0
    %v305 = vmax.f32 %v267, 0.0
    %v306 = vmax.f32 %v270, 0.0
    %v307 = vmax.f32 %v275, 0.0
    %v308 = vmax.f32 %v278, 0.0
    %v309 = vmax.f32 %v283, 0.0
    %v310 = vmax.f32 %v286, 0.0
    %v311 = vmax.f32 %v291, 0.0
    %v312 = vmax.f32 %v294, 0.0
    %v313 = vpack.c.bf16 %v298, %v297
    %v314 = vpack.c.bf16 %v300, %v299
    %v315 = vpack.c.bf16 %v302, %v301
    %v316 = vpack.c.bf16 %v304, %v303
    %v317 = vpack.c.bf16 %v306, %v305
    %v318 = vpack.c.bf16 %v308, %v307
    %v319 = vpack.c.bf16 %v310, %v309
    %v320 = vpack.c.bf16 %v312, %v311
    %v322 = vlaneseq
    %v323 = vshrl.u32 %v322, 7
    %v324 = vsub.s32 0, %v323
    %v325 = vrot.slane %v81, %v324
    %v343 = vunpack.c.l.b16 %v65
    %v344 = vunpack.c.l.b16 %v66
    %v345 = vunpack.c.l.b16 %v67
    %v346 = vunpack.c.l.b16 %v68
    %v347 = vunpack.c.l.b16 %v69
    %v348 = vunpack.c.l.b16 %v70
    %v349 = vunpack.c.l.b16 %v71
    %v350 = vunpack.c.l.b16 %v72
    %v351 = vunpack.c.l.b16 %v73
    %v352 = vunpack.c.l.b16 %v74
    %v353 = vunpack.c.l.b16 %v75
    %v354 = vunpack.c.l.b16 %v76
    %v355 = vunpack.c.l.b16 %v77
    %v356 = vunpack.c.l.b16 %v78
    %v357 = vunpack.c.l.b16 %v79
    %v358 = vunpack.c.l.b16 %v80
    %v359 = vpack.c.b16 %v344, %v343
    %v360 = vpack.c.b16 %v346, %v345
    %v361 = vpack.c.b16 %v348, %v347
    %v362 = vpack.c.b16 %v350, %v349
    %v363 = vpack.c.b16 %v352, %v351
    %v364 = vpack.c.b16 %v354, %v353
    %v365 = vpack.c.b16 %v356, %v355
    %v366 = vpack.c.b16 %v358, %v357
    %375 = vmatprep.subr.bf16.mxu0 0
    %376 = vmatpush1.bf16.msra.mxu0 %v359
    %377 = vmatprep.subr.bf16.mxu0 0
    %378 = vmatpush1.bf16.msra.mxu0 %v360
    %379 = vmatprep.subr.bf16.mxu0 0
    %380 = vmatpush1.bf16.msra.mxu0 %v361
    %381 = vmatprep.subr.bf16.mxu0 0
    %382 = vmatpush1.bf16.msra.mxu0 %v362
    %383 = vmatprep.subr.bf16.mxu0 0
    %384 = vmatpush1.bf16.msra.mxu0 %v363
    %385 = vmatprep.subr.bf16.mxu0 0
    %386 = vmatpush1.bf16.msra.mxu0 %v364
    %387 = vmatprep.subr.bf16.mxu0 0
    %388 = vmatpush1.bf16.msra.mxu0 %v365
    %389 = vmatprep.subr.bf16.mxu0 0
    %390 = vmatpush1.bf16.msra.mxu0 %v366
    %391 = vmatprep.subr.bf16.mxu0 0
    %392 = vmatpush1.bf16.msra.mxu0 0
    %393 = vmatprep.subr.bf16.mxu0 0
    %394 = vmatpush1.bf16.msra.mxu0 0
    %395 = vmatprep.subr.bf16.mxu0 0
    %396 = vmatpush1.bf16.msra.mxu0 0
    %397 = vmatprep.subr.bf16.mxu0 0
    %398 = vmatpush1.bf16.msra.mxu0 0
    %399 = vmatprep.subr.bf16.mxu0 0
    %400 = vmatpush1.bf16.msra.mxu0 0
    %401 = vmatprep.subr.bf16.mxu0 0
    %402 = vmatpush1.bf16.msra.mxu0 0
    %403 = vmatprep.subr.bf16.mxu0 0
    %404 = vmatpush1.bf16.msra.mxu0 0
    %405 = vmatprep.subr.bf16.mxu0 0
    %406 = vmatpush1.bf16.msra.mxu0 0
    %407 = vmatprep.mubr.bf16.mxu0 0
    %408 = vmatmul.mubr.bf16.gmra.mrb[0].mxu0 %v313
    %v409 = vpop.f32.mrb[0].mxu0
    %v410 = vadd.f32 %v325, %v409
    %v411 = vpop.f32.mrb[0].mxu0
    %v412 = vpop.f32.mrb[0].mxu0
    %v413 = vadd.f32 %v325, %v412
    %v414 = vpop.f32.mrb[0].mxu0
    %415 = vmatprep.mubr.bf16.mxu0 0
    %416 = vmatmul.mubr.bf16.gmra.mrb[0].mxu0 %v314
    %v417 = vpop.f32.mrb[0].mxu0
    %v418 = vadd.f32 %v325, %v417
    %v419 = vpop.f32.mrb[0].mxu0
    %v420 = vpop.f32.mrb[0].mxu0
    %v421 = vadd.f32 %v325, %v420
    %v422 = vpop.f32.mrb[0].mxu0
    %423 = vmatprep.mubr.bf16.mxu0 0
    %424 = vmatmul.mubr.bf16.gmra.mrb[0].mxu0 %v315
    %v425 = vpop.f32.mrb[0].mxu0
    %v426 = vadd.f32 %v325, %v425
    %v427 = vpop.f32.mrb[0].mxu0
    %v428 = vpop.f32.mrb[0].mxu0
    %v429 = vadd.f32 %v325, %v428
    %v430 = vpop.f32.mrb[0].mxu0
    %431 = vmatprep.mubr.bf16.mxu0 0
    %432 = vmatmul.mubr.bf16.gmra.mrb[0].mxu0 %v316
    %v433 = vpop.f32.mrb[0].mxu0
    %v434 = vadd.f32 %v325, %v433
    %v435 = vpop.f32.mrb[0].mxu0
    %v436 = vpop.f32.mrb[0].mxu0
    %v437 = vadd.f32 %v325, %v436
    %v438 = vpop.f32.mrb[0].mxu0
    %439 = vmatprep.mubr.bf16.mxu0 0
    %440 = vmatmul.mubr.bf16.gmra.mrb[0].mxu0 %v317
    %v441 = vpop.f32.mrb[0].mxu0
    %v442 = vadd.f32 %v325, %v441
    %v443 = vpop.f32.mrb[0].mxu0
    %v444 = vpop.f32.mrb[0].mxu0
    %v445 = vadd.f32 %v325, %v444
    %v446 = vpop.f32.mrb[0].mxu0
    %447 = vmatprep.mubr.bf16.mxu0 0
    %448 = vmatmul.mubr.bf16.gmra.mrb[0].mxu0 %v318
    %v449 = vpop.f32.mrb[0].mxu0
    %v450 = vadd.f32 %v325, %v449
    %v451 = vpop.f32.mrb[0].mxu0
    %v452 = vpop.f32.mrb[0].mxu0
    %v453 = vadd.f32 %v325, %v452
    %v454 = vpop.f32.mrb[0].mxu0
    %455 = vmatprep.mubr.bf16.mxu0 0
    %456 = vmatmul.mubr.bf16.gmra.mrb[0].mxu0 %v319
    %v457 = vpop.f32.mrb[0].mxu0
    %v458 = vadd.f32 %v325, %v457
    %v459 = vpop.f32.mrb[0].mxu0
    %v460 = vpop.f32.mrb[0].mxu0
    %v461 = vadd.f32 %v325, %v460
    %v462 = vpop.f32.mrb[0].mxu0
    %463 = vmatprep.mubr.bf16.mxu0 0
    %464 = vmatmul.mubr.bf16.gmra.mrb[0].mxu0 %v320
    %v465 = vpop.f32.mrb[0].mxu0
    %v466 = vadd.f32 %v325, %v465
    %v467 = vpop.f32.mrb[0].mxu0
    %v468 = vpop.f32.mrb[0].mxu0
    %v469 = vadd.f32 %v325, %v468
    %v470 = vpop.f32.mrb[0].mxu0
    %471 = vdwg.mxu0
    %v472 = vld [vmem:[%s1] sm:$0xf]
    %v473 = vld [vmem:[%s1 + $0x4] sm:$0xf]
    %v474 = vld [vmem:[%s1 + $0x8] sm:$0xf]
    %v475 = vld [vmem:[%s1 + $0xc] sm:$0xf]
    %v476 = vld [vmem:[%s1 + $0x10] sm:$0xf]
    %v477 = vld [vmem:[%s1 + $0x14] sm:$0xf]
    %v478 = vld [vmem:[%s1 + $0x18] sm:$0xf]
    %v479 = vld [vmem:[%s1 + $0x1c] sm:$0xf]
    %v480 = vld [vmem:[%s1 + $0x20] sm:$0xf]
    %v481 = vld [vmem:[%s1 + $0x24] sm:$0xf]
    %v482 = vld [vmem:[%s1 + $0x28] sm:$0xf]
    %v483 = vld [vmem:[%s1 + $0x2c] sm:$0xf]
    %v484 = vld [vmem:[%s1 + $0x30] sm:$0xf]
    %v485 = vld [vmem:[%s1 + $0x34] sm:$0xf]
    %v486 = vld [vmem:[%s1 + $0x38] sm:$0xf]
    %v487 = vld [vmem:[%s1 + $0x3c] sm:$0xf]
    %v504 = vunpack.c.l.b16 %v472
    %v505 = vunpack.c.l.b16 %v473
    %v506 = vunpack.c.l.b16 %v474
    %v507 = vunpack.c.l.b16 %v475
    %v508 = vunpack.c.l.b16 %v476
    %v509 = vunpack.c.l.b16 %v477
    %v510 = vunpack.c.l.b16 %v478
    %v511 = vunpack.c.l.b16 %v479
    %v512 = vunpack.c.l.b16 %v480
    %v513 = vunpack.c.l.b16 %v481
    %v514 = vunpack.c.l.b16 %v482
    %v515 = vunpack.c.l.b16 %v483
    %v516 = vunpack.c.l.b16 %v484
    %v517 = vunpack.c.l.b16 %v485
    %v518 = vunpack.c.l.b16 %v486
    %v519 = vunpack.c.l.b16 %v487
    %v520 = vpack.c.b16 %v505, %v504
    %v521 = vpack.c.b16 %v507, %v506
    %v522 = vpack.c.b16 %v509, %v508
    %v523 = vpack.c.b16 %v511, %v510
    %v524 = vpack.c.b16 %v513, %v512
    %v525 = vpack.c.b16 %v515, %v514
    %v526 = vpack.c.b16 %v517, %v516
    %v527 = vpack.c.b16 %v519, %v518
    %536 = vmatprep.subr.bf16.mxu0 0
    %537 = vmatpush1.bf16.msra.mxu0 %v184
    %538 = vmatprep.subr.bf16.mxu0 0
    %539 = vmatpush1.bf16.msra.mxu0 %v185
    %540 = vmatprep.subr.bf16.mxu0 0
    %541 = vmatpush1.bf16.msra.mxu0 %v186
    %542 = vmatprep.subr.bf16.mxu0 0
    %543 = vmatpush1.bf16.msra.mxu0 %v187
    %544 = vmatprep.subr.bf16.mxu0 0
    %545 = vmatpush1.bf16.msra.mxu0 %v188
    %546 = vmatprep.subr.bf16.mxu0 0
    %547 = vmatpush1.bf16.msra.mxu0 %v189
    %548 = vmatprep.subr.bf16.mxu0 0
    %549 = vmatpush1.bf16.msra.mxu0 %v190
    %550 = vmatprep.subr.bf16.mxu0 0
    %551 = vmatpush1.bf16.msra.mxu0 %v191
    %552 = vmatprep.subr.bf16.mxu0 0
    %553 = vmatpush1.bf16.msra.mxu0 0
    %554 = vmatprep.subr.bf16.mxu0 0
    %555 = vmatpush1.bf16.msra.mxu0 0
    %556 = vmatprep.subr.bf16.mxu0 0
    %557 = vmatpush1.bf16.msra.mxu0 0
    %558 = vmatprep.subr.bf16.mxu0 0
    %559 = vmatpush1.bf16.msra.mxu0 0
    %560 = vmatprep.subr.bf16.mxu0 0
    %561 = vmatpush1.bf16.msra.mxu0 0
    %562 = vmatprep.subr.bf16.mxu0 0
    %563 = vmatpush1.bf16.msra.mxu0 0
    %564 = vmatprep.subr.bf16.mxu0 0
    %565 = vmatpush1.bf16.msra.mxu0 0
    %566 = vmatprep.subr.bf16.mxu0 0
    %567 = vmatpush1.bf16.msra.mxu0 0
    %568 = vmatprep.mubr.bf16.mxu0 0
    %569 = vmatmul.mubr.bf16.gmra.mrb[0].mxu0 %v520
    %v570 = vpop.f32.mrb[0].mxu0
    %v571 = vadd.f32 %v102, %v570
    %v572 = vpop.f32.mrb[0].mxu0
    %v573 = vpop.f32.mrb[0].mxu0
    %v574 = vadd.f32 %v102, %v573
    %v575 = vpop.f32.mrb[0].mxu0
    %576 = vmatprep.mubr.bf16.mxu0 0
    %577 = vmatmul.mubr.bf16.gmra.mrb[0].mxu0 %v521
    %v578 = vpop.f32.mrb[0].mxu0
    %v579 = vadd.f32 %v102, %v578
    %v580 = vpop.f32.mrb[0].mxu0
    %v581 = vpop.f32.mrb[0].mxu0
    %v582 = vadd.f32 %v102, %v581
    %v583 = vpop.f32.mrb[0].mxu0
    %584 = vmatprep.mubr.bf16.mxu0 0
    %585 = vmatmul.mubr.bf16.gmra.mrb[0].mxu0 %v522
    %v586 = vpop.f32.mrb[0].mxu0
    %v587 = vadd.f32 %v102, %v586
    %v588 = vpop.f32.mrb[0].mxu0
    %v589 = vpop.f32.mrb[0].mxu0
    %v590 = vadd.f32 %v102, %v589
    %v591 = vpop.f32.mrb[0].mxu0
    %592 = vmatprep.mubr.bf16.mxu0 0
    %593 = vmatmul.mubr.bf16.gmra.mrb[0].mxu0 %v523
    %v594 = vpop.f32.mrb[0].mxu0
    %v595 = vadd.f32 %v102, %v594
    %v596 = vpop.f32.mrb[0].mxu0
    %v597 = vpop.f32.mrb[0].mxu0
    %v598 = vadd.f32 %v102, %v597
    %v599 = vpop.f32.mrb[0].mxu0
    %600 = vmatprep.mubr.bf16.mxu0 0
    %601 = vmatmul.mubr.bf16.gmra.mrb[0].mxu0 %v524
    %v602 = vpop.f32.mrb[0].mxu0
    %v603 = vadd.f32 %v102, %v602
    %v604 = vpop.f32.mrb[0].mxu0
    %v605 = vpop.f32.mrb[0].mxu0
    %v606 = vadd.f32 %v102, %v605
    %v607 = vpop.f32.mrb[0].mxu0
    %608 = vmatprep.mubr.bf16.mxu0 0
    %609 = vmatmul.mubr.bf16.gmra.mrb[0].mxu0 %v525
    %v610 = vpop.f32.mrb[0].mxu0
    %v611 = vadd.f32 %v102, %v610
    %v612 = vpop.f32.mrb[0].mxu0
    %v613 = vpop.f32.mrb[0].mxu0
    %v614 = vadd.f32 %v102, %v613
    %v615 = vpop.f32.mrb[0].mxu0
    %616 = vmatprep.mubr.bf16.mxu0 0
    %617 = vmatmul.mubr.bf16.gmra.mrb[0].mxu0 %v526
    %v618 = vpop.f32.mrb[0].mxu0
    %v619 = vadd.f32 %v102, %v618
    %v620 = vpop.f32.mrb[0].mxu0
    %v621 = vpop.f32.mrb[0].mxu0
    %v622 = vadd.f32 %v102, %v621
    %v623 = vpop.f32.mrb[0].mxu0
    %624 = vmatprep.mubr.bf16.mxu0 0
    %625 = vmatmul.mubr.bf16.gmra.mrb[0].mxu0 %v527
    %v626 = vpop.f32.mrb[0].mxu0
    %v627 = vadd.f32 %v102, %v626
    %v628 = vpop.f32.mrb[0].mxu0
    %v629 = vpop.f32.mrb[0].mxu0
    %v630 = vadd.f32 %v102, %v629
    %v631 = vpop.f32.mrb[0].mxu0
    %632 = vdwg.mxu0
    %v633 = vmax.f32 %v571, 0.0
    %v634 = vmax.f32 %v574, 0.0
    %v635 = vmax.f32 %v579, 0.0
    %v636 = vmax.f32 %v582, 0.0
    %v637 = vmax.f32 %v587, 0.0
    %v638 = vmax.f32 %v590, 0.0
    %v639 = vmax.f32 %v595, 0.0
    %v640 = vmax.f32 %v598, 0.0
    %v641 = vmax.f32 %v603, 0.0
    %v642 = vmax.f32 %v606, 0.0
    %v643 = vmax.f32 %v611, 0.0
    %v644 = vmax.f32 %v614, 0.0
    %v645 = vmax.f32 %v619, 0.0
    %v646 = vmax.f32 %v622, 0.0
    %v647 = vmax.f32 %v627, 0.0
    %v648 = vmax.f32 %v630, 0.0
    %v649 = vpack.c.bf16 %v634, %v633
    %v650 = vpack.c.bf16 %v636, %v635
    %v651 = vpack.c.bf16 %v638, %v637
    %v652 = vpack.c.bf16 %v640, %v639
    %v653 = vpack.c.bf16 %v642, %v641
    %v654 = vpack.c.bf16 %v644, %v643
    %v655 = vpack.c.bf16 %v646, %v645
    %v656 = vpack.c.bf16 %v648, %v647
    %657 = vmatprep.subr.bf16.mxu0 0
    %658 = vmatpush1.bf16.msra.mxu0 %v359
    %659 = vmatprep.subr.bf16.mxu0 0
    %660 = vmatpush1.bf16.msra.mxu0 %v360
    %661 = vmatprep.subr.bf16.mxu0 0
    %662 = vmatpush1.bf16.msra.mxu0 %v361
    %663 = vmatprep.subr.bf16.mxu0 0
    %664 = vmatpush1.bf16.msra.mxu0 %v362
    %665 = vmatprep.subr.bf16.mxu0 0
    %666 = vmatpush1.bf16.msra.mxu0 %v363
    %667 = vmatprep.subr.bf16.mxu0 0
    %668 = vmatpush1.bf16.msra.mxu0 %v364
    %669 = vmatprep.subr.bf16.mxu0 0
    %670 = vmatpush1.bf16.msra.mxu0 %v365
    %671 = vmatprep.subr.bf16.mxu0 0
    %672 = vmatpush1.bf16.msra.mxu0 %v366
    %673 = vmatprep.subr.bf16.mxu0 0
    %674 = vmatpush1.bf16.msra.mxu0 0
    %675 = vmatprep.subr.bf16.mxu0 0
    %676 = vmatpush1.bf16.msra.mxu0 0
    %677 = vmatprep.subr.bf16.mxu0 0
    %678 = vmatpush1.bf16.msra.mxu0 0
    %679 = vmatprep.subr.bf16.mxu0 0
    %680 = vmatpush1.bf16.msra.mxu0 0
    %681 = vmatprep.subr.bf16.mxu0 0
    %682 = vmatpush1.bf16.msra.mxu0 0
    %683 = vmatprep.subr.bf16.mxu0 0
    %684 = vmatpush1.bf16.msra.mxu0 0
    %685 = vmatprep.subr.bf16.mxu0 0
    %686 = vmatpush1.bf16.msra.mxu0 0
    %687 = vmatprep.subr.bf16.mxu0 0
    %688 = vmatpush1.bf16.msra.mxu0 0
    %689 = vmatprep.mubr.bf16.mxu0 0
    %690 = vmatmul.mubr.bf16.gmra.mrb[0].mxu0 %v649
    %v691 = vpop.f32.mrb[0].mxu0
    %v692 = vadd.f32 %v325, %v691
    %v693 = vpop.f32.mrb[0].mxu0
    %v694 = vpop.f32.mrb[0].mxu0
    %v695 = vadd.f32 %v325, %v694
    %v696 = vpop.f32.mrb[0].mxu0
    %697 = vmatprep.mubr.bf16.mxu0 0
    %698 = vmatmul.mubr.bf16.gmra.mrb[0].mxu0 %v650
    %v699 = vpop.f32.mrb[0].mxu0
    %v700 = vadd.f32 %v325, %v699
    %v701 = vpop.f32.mrb[0].mxu0
    %v702 = vpop.f32.mrb[0].mxu0
    %v703 = vadd.f32 %v325, %v702
    %v704 = vpop.f32.mrb[0].mxu0
    %705 = vmatprep.mubr.bf16.mxu0 0
    %706 = vmatmul.mubr.bf16.gmra.mrb[0].mxu0 %v651
    %v707 = vpop.f32.mrb[0].mxu0
    %v708 = vadd.f32 %v325, %v707
    %v709 = vpop.f32.mrb[0].mxu0
    %v710 = vpop.f32.mrb[0].mxu0
    %v711 = vadd.f32 %v325, %v710
    %v712 = vpop.f32.mrb[0].mxu0
    %713 = vmatprep.mubr.bf16.mxu0 0
    %714 = vmatmul.mubr.bf16.gmra.mrb[0].mxu0 %v652
    %v715 = vpop.f32.mrb[0].mxu0
    %v716 = vadd.f32 %v325, %v715
    %v717 = vpop.f32.mrb[0].mxu0
    %v718 = vpop.f32.mrb[0].mxu0
    %v719 = vadd.f32 %v325, %v718
    %v720 = vpop.f32.mrb[0].mxu0
    %721 = vmatprep.mubr.bf16.mxu0 0
    %722 = vmatmul.mubr.bf16.gmra.mrb[0].mxu0 %v653
    %v723 = vpop.f32.mrb[0].mxu0
    %v724 = vadd.f32 %v325, %v723
    %v725 = vpop.f32.mrb[0].mxu0
    %v726 = vpop.f32.mrb[0].mxu0
    %v727 = vadd.f32 %v325, %v726
    %v728 = vpop.f32.mrb[0].mxu0
    %729 = vmatprep.mubr.bf16.mxu0 0
    %730 = vmatmul.mubr.bf16.gmra.mrb[0].mxu0 %v654
    %v731 = vpop.f32.mrb[0].mxu0
    %v732 = vadd.f32 %v325, %v731
    %v733 = vpop.f32.mrb[0].mxu0
    %v734 = vpop.f32.mrb[0].mxu0
    %v735 = vadd.f32 %v325, %v734
    %v736 = vpop.f32.mrb[0].mxu0
    %737 = vmatprep.mubr.bf16.mxu0 0
    %738 = vmatmul.mubr.bf16.gmra.mrb[0].mxu0 %v655
    %v739 = vpop.f32.mrb[0].mxu0
    %v740 = vadd.f32 %v325, %v739
    %v741 = vpop.f32.mrb[0].mxu0
    %v742 = vpop.f32.mrb[0].mxu0
    %v743 = vadd.f32 %v325, %v742
    %v744 = vpop.f32.mrb[0].mxu0
    %745 = vmatprep.mubr.bf16.mxu0 0
    %746 = vmatmul.mubr.bf16.gmra.mrb[0].mxu0 %v656
    %v747 = vpop.f32.mrb[0].mxu0
    %v748 = vadd.f32 %v325, %v747
    %v749 = vpop.f32.mrb[0].mxu0
    %v750 = vpop.f32.mrb[0].mxu0
    %v751 = vadd.f32 %v325, %v750
    %v752 = vpop.f32.mrb[0].mxu0
    %753 = vdwg.mxu0
    %v754 = vld [vmem:[%s2] sm:$0xf]
    %v755 = vld [vmem:[%s2 + $0x4] sm:$0xf]
    %v756 = vld [vmem:[%s2 + $0x8] sm:$0xf]
    %v757 = vld [vmem:[%s2 + $0xc] sm:$0xf]
    %v758 = vld [vmem:[%s2 + $0x10] sm:$0xf]
    %v759 = vld [vmem:[%s2 + $0x14] sm:$0xf]
    %v760 = vld [vmem:[%s2 + $0x18] sm:$0xf]
    %v761 = vld [vmem:[%s2 + $0x1c] sm:$0xf]
    %v762 = vld [vmem:[%s2 + $0x20] sm:$0xf]
    %v763 = vld [vmem:[%s2 + $0x24] sm:$0xf]
    %v764 = vld [vmem:[%s2 + $0x28] sm:$0xf]
    %v765 = vld [vmem:[%s2 + $0x2c] sm:$0xf]
    %v766 = vld [vmem:[%s2 + $0x30] sm:$0xf]
    %v767 = vld [vmem:[%s2 + $0x34] sm:$0xf]
    %v768 = vld [vmem:[%s2 + $0x38] sm:$0xf]
    %v769 = vld [vmem:[%s2 + $0x3c] sm:$0xf]
    %v786 = vunpack.c.l.b16 %v754
    %v787 = vunpack.c.l.b16 %v755
    %v788 = vunpack.c.l.b16 %v756
    %v789 = vunpack.c.l.b16 %v757
    %v790 = vunpack.c.l.b16 %v758
    %v791 = vunpack.c.l.b16 %v759
    %v792 = vunpack.c.l.b16 %v760
    %v793 = vunpack.c.l.b16 %v761
    %v794 = vunpack.c.l.b16 %v762
    %v795 = vunpack.c.l.b16 %v763
    %v796 = vunpack.c.l.b16 %v764
    %v797 = vunpack.c.l.b16 %v765
    %v798 = vunpack.c.l.b16 %v766
    %v799 = vunpack.c.l.b16 %v767
    %v800 = vunpack.c.l.b16 %v768
    %v801 = vunpack.c.l.b16 %v769
    %v802 = vpack.c.b16 %v787, %v786
    %v803 = vpack.c.b16 %v789, %v788
    %v804 = vpack.c.b16 %v791, %v790
    %v805 = vpack.c.b16 %v793, %v792
    %v806 = vpack.c.b16 %v795, %v794
    %v807 = vpack.c.b16 %v797, %v796
    %v808 = vpack.c.b16 %v799, %v798
    %v809 = vpack.c.b16 %v801, %v800
    %818 = vmatprep.subr.bf16.mxu0 0
    %819 = vmatpush1.bf16.msra.mxu0 %v184
    %820 = vmatprep.subr.bf16.mxu0 0
    %821 = vmatpush1.bf16.msra.mxu0 %v185
    %822 = vmatprep.subr.bf16.mxu0 0
    %823 = vmatpush1.bf16.msra.mxu0 %v186
    %824 = vmatprep.subr.bf16.mxu0 0
    %825 = vmatpush1.bf16.msra.mxu0 %v187
    %826 = vmatprep.subr.bf16.mxu0 0
    %827 = vmatpush1.bf16.msra.mxu0 %v188
    %828 = vmatprep.subr.bf16.mxu0 0
    %829 = vmatpush1.bf16.msra.mxu0 %v189
    %830 = vmatprep.subr.bf16.mxu0 0
    %831 = vmatpush1.bf16.msra.mxu0 %v190
    %832 = vmatprep.subr.bf16.mxu0 0
    %833 = vmatpush1.bf16.msra.mxu0 %v191
    %834 = vmatprep.subr.bf16.mxu0 0
    %835 = vmatpush1.bf16.msra.mxu0 0
    %836 = vmatprep.subr.bf16.mxu0 0
    %837 = vmatpush1.bf16.msra.mxu0 0
    %838 = vmatprep.subr.bf16.mxu0 0
    %839 = vmatpush1.bf16.msra.mxu0 0
    %840 = vmatprep.subr.bf16.mxu0 0
    %841 = vmatpush1.bf16.msra.mxu0 0
    %842 = vmatprep.subr.bf16.mxu0 0
    %843 = vmatpush1.bf16.msra.mxu0 0
    %844 = vmatprep.subr.bf16.mxu0 0
    %845 = vmatpush1.bf16.msra.mxu0 0
    %846 = vmatprep.subr.bf16.mxu0 0
    %847 = vmatpush1.bf16.msra.mxu0 0
    %848 = vmatprep.subr.bf16.mxu0 0
    %849 = vmatpush1.bf16.msra.mxu0 0
    %850 = vmatprep.mubr.bf16.mxu0 0
    %851 = vmatmul.mubr.bf16.gmra.mrb[0].mxu0 %v802
    %v852 = vpop.f32.mrb[0].mxu0
    %v853 = vadd.f32 %v102, %v852
    %v854 = vpop.f32.mrb[0].mxu0
    %v855 = vpop.f32.mrb[0].mxu0
    %v856 = vadd.f32 %v102, %v855
    %v857 = vpop.f32.mrb[0].mxu0
    %858 = vmatprep.mubr.bf16.mxu0 0
    %859 = vmatmul.mubr.bf16.gmra.mrb[0].mxu0 %v803
    %v860 = vpop.f32.mrb[0].mxu0
    %v861 = vadd.f32 %v102, %v860
    %v862 = vpop.f32.mrb[0].mxu0
    %v863 = vpop.f32.mrb[0].mxu0
    %v864 = vadd.f32 %v102, %v863
    %v865 = vpop.f32.mrb[0].mxu0
    %866 = vmatprep.mubr.bf16.mxu0 0
    %867 = vmatmul.mubr.bf16.gmra.mrb[0].mxu0 %v804
    %v868 = vpop.f32.mrb[0].mxu0
    %v869 = vadd.f32 %v102, %v868
    %v870 = vpop.f32.mrb[0].mxu0
    %v871 = vpop.f32.mrb[0].mxu0
    %v872 = vadd.f32 %v102, %v871
    %v873 = vpop.f32.mrb[0].mxu0
    %874 = vmatprep.mubr.bf16.mxu0 0
    %875 = vmatmul.mubr.bf16.gmra.mrb[0].mxu0 %v805
    %v876 = vpop.f32.mrb[0].mxu0
    %v877 = vadd.f32 %v102, %v876
    %v878 = vpop.f32.mrb[0].mxu0
    %v879 = vpop.f32.mrb[0].mxu0
    %v880 = vadd.f32 %v102, %v879
    %v881 = vpop.f32.mrb[0].mxu0
    %882 = vmatprep.mubr.bf16.mxu0 0
    %883 = vmatmul.mubr.bf16.gmra.mrb[0].mxu0 %v806
    %v884 = vpop.f32.mrb[0].mxu0
    %v885 = vadd.f32 %v102, %v884
    %v886 = vpop.f32.mrb[0].mxu0
    %v887 = vpop.f32.mrb[0].mxu0
    %v888 = vadd.f32 %v102, %v887
    %v889 = vpop.f32.mrb[0].mxu0
    %890 = vmatprep.mubr.bf16.mxu0 0
    %891 = vmatmul.mubr.bf16.gmra.mrb[0].mxu0 %v807
    %v892 = vpop.f32.mrb[0].mxu0
    %v893 = vadd.f32 %v102, %v892
    %v894 = vpop.f32.mrb[0].mxu0
    %v895 = vpop.f32.mrb[0].mxu0
    %v896 = vadd.f32 %v102, %v895
    %v897 = vpop.f32.mrb[0].mxu0
    %898 = vmatprep.mubr.bf16.mxu0 0
    %899 = vmatmul.mubr.bf16.gmra.mrb[0].mxu0 %v808
    %v900 = vpop.f32.mrb[0].mxu0
    %v901 = vadd.f32 %v102, %v900
    %v902 = vpop.f32.mrb[0].mxu0
    %v903 = vpop.f32.mrb[0].mxu0
    %v904 = vadd.f32 %v102, %v903
    %v905 = vpop.f32.mrb[0].mxu0
    %906 = vmatprep.mubr.bf16.mxu0 0
    %907 = vmatmul.mubr.bf16.gmra.mrb[0].mxu0 %v809
    %v908 = vpop.f32.mrb[0].mxu0
    %v909 = vadd.f32 %v102, %v908
    %v910 = vpop.f32.mrb[0].mxu0
    %v911 = vpop.f32.mrb[0].mxu0
    %v912 = vadd.f32 %v102, %v911
    %v913 = vpop.f32.mrb[0].mxu0
    %914 = vdwg.mxu0
    %v915 = vmax.f32 %v853, 0.0
    %v916 = vmax.f32 %v856, 0.0
    %v917 = vmax.f32 %v861, 0.0
    %v918 = vmax.f32 %v864, 0.0
    %v919 = vmax.f32 %v869, 0.0
    %v920 = vmax.f32 %v872, 0.0
    %v921 = vmax.f32 %v877, 0.0
    %v922 = vmax.f32 %v880, 0.0
    %v923 = vmax.f32 %v885, 0.0
    %v924 = vmax.f32 %v888, 0.0
    %v925 = vmax.f32 %v893, 0.0
    %v926 = vmax.f32 %v896, 0.0
    %v927 = vmax.f32 %v901, 0.0
    %v928 = vmax.f32 %v904, 0.0
    %v929 = vmax.f32 %v909, 0.0
    %v930 = vmax.f32 %v912, 0.0
    %v931 = vpack.c.bf16 %v916, %v915
    %v932 = vpack.c.bf16 %v918, %v917
    %v933 = vpack.c.bf16 %v920, %v919
    %v934 = vpack.c.bf16 %v922, %v921
    %v935 = vpack.c.bf16 %v924, %v923
    %v936 = vpack.c.bf16 %v926, %v925
    %v937 = vpack.c.bf16 %v928, %v927
    %v938 = vpack.c.bf16 %v930, %v929
    %939 = vmatprep.subr.bf16.mxu0 0
    %940 = vmatpush1.bf16.msra.mxu0 %v359
    %941 = vmatprep.subr.bf16.mxu0 0
    %942 = vmatpush1.bf16.msra.mxu0 %v360
    %943 = vmatprep.subr.bf16.mxu0 0
    %944 = vmatpush1.bf16.msra.mxu0 %v361
    %945 = vmatprep.subr.bf16.mxu0 0
    %946 = vmatpush1.bf16.msra.mxu0 %v362
    %947 = vmatprep.subr.bf16.mxu0 0
    %948 = vmatpush1.bf16.msra.mxu0 %v363
    %949 = vmatprep.subr.bf16.mxu0 0
    %950 = vmatpush1.bf16.msra.mxu0 %v364
    %951 = vmatprep.subr.bf16.mxu0 0
    %952 = vmatpush1.bf16.msra.mxu0 %v365
    %953 = vmatprep.subr.bf16.mxu0 0
    %954 = vmatpush1.bf16.msra.mxu0 %v366
    %955 = vmatprep.subr.bf16.mxu0 0
    %956 = vmatpush1.bf16.msra.mxu0 0
    %957 = vmatprep.subr.bf16.mxu0 0
    %958 = vmatpush1.bf16.msra.mxu0 0
    %959 = vmatprep.subr.bf16.mxu0 0
    %960 = vmatpush1.bf16.msra.mxu0 0
    %961 = vmatprep.subr.bf16.mxu0 0
    %962 = vmatpush1.bf16.msra.mxu0 0
    %963 = vmatprep.subr.bf16.mxu0 0
    %964 = vmatpush1.bf16.msra.mxu0 0
    %965 = vmatprep.subr.bf16.mxu0 0
    %966 = vmatpush1.bf16.msra.mxu0 0
    %967 = vmatprep.subr.bf16.mxu0 0
    %968 = vmatpush1.bf16.msra.mxu0 0
    %969 = vmatprep.subr.bf16.mxu0 0
    %970 = vmatpush1.bf16.msra.mxu0 0
    %971 = vmatprep.mubr.bf16.mxu0 0
    %972 = vmatmul.mubr.bf16.gmra.mrb[0].mxu0 %v931
    %v973 = vpop.f32.mrb[0].mxu0
    %v974 = vadd.f32 %v325, %v973
    %v975 = vpop.f32.mrb[0].mxu0
    %v976 = vpop.f32.mrb[0].mxu0
    %v977 = vadd.f32 %v325, %v976
    %v978 = vpop.f32.mrb[0].mxu0
    %979 = vmatprep.mubr.bf16.mxu0 0
    %980 = vmatmul.mubr.bf16.gmra.mrb[0].mxu0 %v932
    %v981 = vpop.f32.mrb[0].mxu0
    %v982 = vadd.f32 %v325, %v981
    %v983 = vpop.f32.mrb[0].mxu0
    %v984 = vpop.f32.mrb[0].mxu0
    %v985 = vadd.f32 %v325, %v984
    %v986 = vpop.f32.mrb[0].mxu0
    %987 = vmatprep.mubr.bf16.mxu0 0
    %988 = vmatmul.mubr.bf16.gmra.mrb[0].mxu0 %v933
    %v989 = vpop.f32.mrb[0].mxu0
    %v990 = vadd.f32 %v325, %v989
    %v991 = vpop.f32.mrb[0].mxu0
    %v992 = vpop.f32.mrb[0].mxu0
    %v993 = vadd.f32 %v325, %v992
    %v994 = vpop.f32.mrb[0].mxu0
    %995 = vmatprep.mubr.bf16.mxu0 0
    %996 = vmatmul.mubr.bf16.gmra.mrb[0].mxu0 %v934
    %v997 = vpop.f32.mrb[0].mxu0
    %v998 = vadd.f32 %v325, %v997
    %v999 = vpop.f32.mrb[0].mxu0
    %v1000 = vpop.f32.mrb[0].mxu0
    %v1001 = vadd.f32 %v325, %v1000
    %v1002 = vpop.f32.mrb[0].mxu0
    %1003 = vmatprep.mubr.bf16.mxu0 0
    %1004 = vmatmul.mubr.bf16.gmra.mrb[0].mxu0 %v935
    %v1005 = vpop.f32.mrb[0].mxu0
    %v1006 = vadd.f32 %v325, %v1005
    %v1007 = vpop.f32.mrb[0].mxu0
    %v1008 = vpop.f32.mrb[0].mxu0
    %v1009 = vadd.f32 %v325, %v1008
    %v1010 = vpop.f32.mrb[0].mxu0
    %1011 = vmatprep.mubr.bf16.mxu0 0
    %1012 = vmatmul.mubr.bf16.gmra.mrb[0].mxu0 %v936
    %v1013 = vpop.f32.mrb[0].mxu0
    %v1014 = vadd.f32 %v325, %v1013
    %v1015 = vpop.f32.mrb[0].mxu0
    %v1016 = vpop.f32.mrb[0].mxu0
    %v1017 = vadd.f32 %v325, %v1016
    %v1018 = vpop.f32.mrb[0].mxu0
    %1019 = vmatprep.mubr.bf16.mxu0 0
    %1020 = vmatmul.mubr.bf16.gmra.mrb[0].mxu0 %v937
    %v1021 = vpop.f32.mrb[0].mxu0
    %v1022 = vadd.f32 %v325, %v1021
    %v1023 = vpop.f32.mrb[0].mxu0
    %v1024 = vpop.f32.mrb[0].mxu0
    %v1025 = vadd.f32 %v325, %v1024
    %v1026 = vpop.f32.mrb[0].mxu0
    %1027 = vmatprep.mubr.bf16.mxu0 0
    %1028 = vmatmul.mubr.bf16.gmra.mrb[0].mxu0 %v938
    %v1029 = vpop.f32.mrb[0].mxu0
    %v1030 = vadd.f32 %v325, %v1029
    %v1031 = vpop.f32.mrb[0].mxu0
    %v1032 = vpop.f32.mrb[0].mxu0
    %v1033 = vadd.f32 %v325, %v1032
    %v1034 = vpop.f32.mrb[0].mxu0
    %1035 = vdwg.mxu0
    %v1036 = vld [vmem:[%s3] sm:$0xff]
    %v1037 = vld [vmem:[%s3 + $0x8] sm:$0xff]
    %v1038 = vld [vmem:[%s3 + $0x10] sm:$0xff]
    %v1039 = vld [vmem:[%s3 + $0x18] sm:$0xff]
    %v1040 = vld [vmem:[%s3 + $0x20] sm:$0xff]
    %v1041 = vld [vmem:[%s3 + $0x28] sm:$0xff]
    %v1042 = vld [vmem:[%s3 + $0x30] sm:$0xff]
    %v1043 = vld [vmem:[%s3 + $0x38] sm:$0xff]
    %v1044 = vld [vmem:[%s3 + $0x40] sm:$0xff]
    %v1045 = vld [vmem:[%s3 + $0x48] sm:$0xff]
    %v1046 = vld [vmem:[%s3 + $0x50] sm:$0xff]
    %v1047 = vld [vmem:[%s3 + $0x58] sm:$0xff]
    %v1048 = vld [vmem:[%s3 + $0x60] sm:$0xff]
    %v1049 = vld [vmem:[%s3 + $0x68] sm:$0xff]
    %v1050 = vld [vmem:[%s3 + $0x70] sm:$0xff]
    %v1051 = vld [vmem:[%s3 + $0x78] sm:$0xff]
    %v1052 = vlaneseq
    %v1053 = vand.u32 %v1052, 127
    %1054 = vset.pattern.permute.xlu0 0
    %1055 = vperm.xlu0 %1054, %v1036
    %v1056 = vpop.permute.xlu0 %1055
    %1057 = vset.pattern.permute.xlu0 0
    %1058 = vperm.xlu0 %1057, %v1037
    %v1059 = vpop.permute.xlu0 %1058
    %1060 = vset.pattern.permute.xlu0 0
    %1061 = vperm.xlu0 %1060, %v1038
    %v1062 = vpop.permute.xlu0 %1061
    %1063 = vset.pattern.permute.xlu0 0
    %1064 = vperm.xlu0 %1063, %v1039
    %v1065 = vpop.permute.xlu0 %1064
    %1066 = vset.pattern.permute.xlu0 0
    %1067 = vperm.xlu0 %1066, %v1040
    %v1068 = vpop.permute.xlu0 %1067
    %1069 = vset.pattern.permute.xlu0 0
    %1070 = vperm.xlu0 %1069, %v1041
    %v1071 = vpop.permute.xlu0 %1070
    %1072 = vset.pattern.permute.xlu0 0
    %1073 = vperm.xlu0 %1072, %v1042
    %v1074 = vpop.permute.xlu0 %1073
    %1075 = vset.pattern.permute.xlu0 0
    %1076 = vperm.xlu0 %1075, %v1043
    %v1077 = vpop.permute.xlu0 %1076
    %1078 = vset.pattern.permute.xlu0 0
    %1079 = vperm.xlu0 %1078, %v1044
    %v1080 = vpop.permute.xlu0 %1079
    %1081 = vset.pattern.permute.xlu0 0
    %1082 = vperm.xlu0 %1081, %v1045
    %v1083 = vpop.permute.xlu0 %1082
    %1084 = vset.pattern.permute.xlu0 0
    %1085 = vperm.xlu0 %1084, %v1046
    %v1086 = vpop.permute.xlu0 %1085
    %1087 = vset.pattern.permute.xlu0 0
    %1088 = vperm.xlu0 %1087, %v1047
    %v1089 = vpop.permute.xlu0 %1088
    %1090 = vset.pattern.permute.xlu0 0
    %1091 = vperm.xlu0 %1090, %v1048
    %v1092 = vpop.permute.xlu0 %1091
    %1093 = vset.pattern.permute.xlu0 0
    %1094 = vperm.xlu0 %1093, %v1049
    %v1095 = vpop.permute.xlu0 %1094
    %1096 = vset.pattern.permute.xlu0 0
    %1097 = vperm.xlu0 %1096, %v1050
    %v1098 = vpop.permute.xlu0 %1097
    %1099 = vset.pattern.permute.xlu0 0
    %1100 = vperm.xlu0 %1099, %v1051
    %v1101 = vpop.permute.xlu0 %1100
    %vm1102 = vcmp.eq.s32.totalorder %v1053, %v1056
    %vm1103 = vcmp.eq.s32.totalorder %v1053, %v1059
    %vm1104 = vcmp.eq.s32.totalorder %v1053, %v1062
    %vm1105 = vcmp.eq.s32.totalorder %v1053, %v1065
    %vm1106 = vcmp.eq.s32.totalorder %v1053, %v1068
    %vm1107 = vcmp.eq.s32.totalorder %v1053, %v1071
    %vm1108 = vcmp.eq.s32.totalorder %v1053, %v1074
    %vm1109 = vcmp.eq.s32.totalorder %v1053, %v1077
    %vm1110 = vcmp.eq.s32.totalorder %v1053, %v1080
    %vm1111 = vcmp.eq.s32.totalorder %v1053, %v1083
    %vm1112 = vcmp.eq.s32.totalorder %v1053, %v1086
    %vm1113 = vcmp.eq.s32.totalorder %v1053, %v1089
    %vm1114 = vcmp.eq.s32.totalorder %v1053, %v1092
    %vm1115 = vcmp.eq.s32.totalorder %v1053, %v1095
    %vm1116 = vcmp.eq.s32.totalorder %v1053, %v1098
    %vm1117 = vcmp.eq.s32.totalorder %v1053, %v1101
    %v1118 = vsel %vm1102, 1, 0
    %v1119 = vsel %vm1103, 1, 0
    %v1120 = vsel %vm1104, 1, 0
    %v1121 = vsel %vm1105, 1, 0
    %v1122 = vsel %vm1106, 1, 0
    %v1123 = vsel %vm1107, 1, 0
    %v1124 = vsel %vm1108, 1, 0
    %v1125 = vsel %vm1109, 1, 0
    %v1126 = vsel %vm1110, 1, 0
    %v1127 = vsel %vm1111, 1, 0
    %v1128 = vsel %vm1112, 1, 0
    %v1129 = vsel %vm1113, 1, 0
    %v1130 = vsel %vm1114, 1, 0
    %v1131 = vsel %vm1115, 1, 0
    %v1132 = vsel %vm1116, 1, 0
    %v1133 = vsel %vm1117, 1, 0
    %v1134 = vcvt.s32.f32 %v1118
    %v1135 = vcvt.s32.f32 %v1119
    %v1136 = vcvt.s32.f32 %v1120
    %v1137 = vcvt.s32.f32 %v1121
    %v1138 = vcvt.s32.f32 %v1122
    %v1139 = vcvt.s32.f32 %v1123
    %v1140 = vcvt.s32.f32 %v1124
    %v1141 = vcvt.s32.f32 %v1125
    %v1142 = vcvt.s32.f32 %v1126
    %v1143 = vcvt.s32.f32 %v1127
    %v1144 = vcvt.s32.f32 %v1128
    %v1145 = vcvt.s32.f32 %v1129
    %v1146 = vcvt.s32.f32 %v1130
    %v1147 = vcvt.s32.f32 %v1131
    %v1148 = vcvt.s32.f32 %v1132
    %v1149 = vcvt.s32.f32 %v1133
    %vm1150 = vcmp.ge.s32.totalorder %v1036, 0
    %vm1151 = vcmp.ge.s32.totalorder %v1037, 0
    %vm1152 = vcmp.ge.s32.totalorder %v1038, 0
    %vm1153 = vcmp.ge.s32.totalorder %v1039, 0
    %vm1154 = vcmp.ge.s32.totalorder %v1040, 0
    %vm1155 = vcmp.ge.s32.totalorder %v1041, 0
    %vm1156 = vcmp.ge.s32.totalorder %v1042, 0
    %vm1157 = vcmp.ge.s32.totalorder %v1043, 0
    %vm1158 = vcmp.ge.s32.totalorder %v1044, 0
    %vm1159 = vcmp.ge.s32.totalorder %v1045, 0
    %vm1160 = vcmp.ge.s32.totalorder %v1046, 0
    %vm1161 = vcmp.ge.s32.totalorder %v1047, 0
    %vm1162 = vcmp.ge.s32.totalorder %v1048, 0
    %vm1163 = vcmp.ge.s32.totalorder %v1049, 0
    %vm1164 = vcmp.ge.s32.totalorder %v1050, 0
    %vm1165 = vcmp.ge.s32.totalorder %v1051, 0
    %v1166 = vsel %vm1150, 1, 0
    %v1167 = vsel %vm1151, 1, 0
    %v1168 = vsel %vm1152, 1, 0
    %v1169 = vsel %vm1153, 1, 0
    %v1170 = vsel %vm1154, 1, 0
    %v1171 = vsel %vm1155, 1, 0
    %v1172 = vsel %vm1156, 1, 0
    %v1173 = vsel %vm1157, 1, 0
    %v1174 = vsel %vm1158, 1, 0
    %v1175 = vsel %vm1159, 1, 0
    %v1176 = vsel %vm1160, 1, 0
    %v1177 = vsel %vm1161, 1, 0
    %v1178 = vsel %vm1162, 1, 0
    %v1179 = vsel %vm1163, 1, 0
    %v1180 = vsel %vm1164, 1, 0
    %v1181 = vsel %vm1165, 1, 0
    %v1182 = vcvt.s32.f32 %v1166
    %v1183 = vcvt.s32.f32 %v1167
    %v1184 = vcvt.s32.f32 %v1168
    %v1185 = vcvt.s32.f32 %v1169
    %v1186 = vcvt.s32.f32 %v1170
    %v1187 = vcvt.s32.f32 %v1171
    %v1188 = vcvt.s32.f32 %v1172
    %v1189 = vcvt.s32.f32 %v1173
    %v1190 = vcvt.s32.f32 %v1174
    %v1191 = vcvt.s32.f32 %v1175
    %v1192 = vcvt.s32.f32 %v1176
    %v1193 = vcvt.s32.f32 %v1177
    %v1194 = vcvt.s32.f32 %v1178
    %v1195 = vcvt.s32.f32 %v1179
    %v1196 = vcvt.s32.f32 %v1180
    %v1197 = vcvt.s32.f32 %v1181
    %v1198 = vmul.f32 %v1134, %v410
    %v1199 = vmul.f32 %v1135, %v413
    %v1200 = vmul.f32 %v1136, %v418
    %v1201 = vmul.f32 %v1137, %v421
    %v1202 = vmul.f32 %v1138, %v426
    %v1203 = vmul.f32 %v1139, %v429
    %v1204 = vmul.f32 %v1140, %v434
    %v1205 = vmul.f32 %v1141, %v437
    %v1206 = vmul.f32 %v1142, %v442
    %v1207 = vmul.f32 %v1143, %v445
    %v1208 = vmul.f32 %v1144, %v450
    %v1209 = vmul.f32 %v1145, %v453
    %v1210 = vmul.f32 %v1146, %v458
    %v1211 = vmul.f32 %v1147, %v461
    %v1212 = vmul.f32 %v1148, %v466
    %v1213 = vmul.f32 %v1149, %v469
    %v1214 = vadd.f32 %v1198, %v1199
    %v1215 = vadd.f32 %v1214, %v1200
    %v1216 = vadd.f32 %v1215, %v1201
    %v1217 = vadd.f32 %v1216, %v1202
    %v1218 = vadd.f32 %v1217, %v1203
    %v1219 = vadd.f32 %v1218, %v1204
    %v1220 = vadd.f32 %v1219, %v1205
    %v1221 = vadd.f32 %v1220, %v1206
    %v1222 = vadd.f32 %v1221, %v1207
    %v1223 = vadd.f32 %v1222, %v1208
    %v1224 = vadd.f32 %v1223, %v1209
    %v1225 = vadd.f32 %v1224, %v1210
    %v1226 = vadd.f32 %v1225, %v1211
    %v1227 = vadd.f32 %v1226, %v1212
    %v1228 = vadd.f32 %v1227, %v1213
    %v1229 = vrot.slane %v1228, 4
    %v1230 = vadd.f32 %v1228, %v1229
    %v1231 = vrot.slane %v1230, 2
    %v1232 = vadd.f32 %v1230, %v1231
    %v1233 = vrot.slane %v1232, 1
    %v1234 = vadd.f32 %v1232, %v1233
    %1236 = vset.pattern.permute.xlu0 0
    %1237 = vperm.xlu0 %1236, %v1182
    %v1238 = vpop.permute.xlu0 %1237
    %1241 = vset.pattern.permute.xlu0 0
    %1242 = vperm.xlu0 %1241, %v1183
    %v1243 = vpop.permute.xlu0 %1242
    %1246 = vset.pattern.permute.xlu0 0
    %1247 = vperm.xlu0 %1246, %v1184
    %v1248 = vpop.permute.xlu0 %1247
    %1251 = vset.pattern.permute.xlu0 0
    %1252 = vperm.xlu0 %1251, %v1185
    %v1253 = vpop.permute.xlu0 %1252
    %1256 = vset.pattern.permute.xlu0 0
    %1257 = vperm.xlu0 %1256, %v1186
    %v1258 = vpop.permute.xlu0 %1257
    %1261 = vset.pattern.permute.xlu0 0
    %1262 = vperm.xlu0 %1261, %v1187
    %v1263 = vpop.permute.xlu0 %1262
    %1266 = vset.pattern.permute.xlu0 0
    %1267 = vperm.xlu0 %1266, %v1188
    %v1268 = vpop.permute.xlu0 %1267
    %1271 = vset.pattern.permute.xlu0 0
    %1272 = vperm.xlu0 %1271, %v1189
    %v1273 = vpop.permute.xlu0 %1272
    %1276 = vset.pattern.permute.xlu0 0
    %1277 = vperm.xlu0 %1276, %v1190
    %v1278 = vpop.permute.xlu0 %1277
    %1281 = vset.pattern.permute.xlu0 0
    %1282 = vperm.xlu0 %1281, %v1191
    %v1283 = vpop.permute.xlu0 %1282
    %1286 = vset.pattern.permute.xlu0 0
    %1287 = vperm.xlu0 %1286, %v1192
    %v1288 = vpop.permute.xlu0 %1287
    %1291 = vset.pattern.permute.xlu0 0
    %1292 = vperm.xlu0 %1291, %v1193
    %v1293 = vpop.permute.xlu0 %1292
    %1296 = vset.pattern.permute.xlu0 0
    %1297 = vperm.xlu0 %1296, %v1194
    %v1298 = vpop.permute.xlu0 %1297
    %1301 = vset.pattern.permute.xlu0 0
    %1302 = vperm.xlu0 %1301, %v1195
    %v1303 = vpop.permute.xlu0 %1302
    %1306 = vset.pattern.permute.xlu0 0
    %1307 = vperm.xlu0 %1306, %v1196
    %v1308 = vpop.permute.xlu0 %1307
    %1311 = vset.pattern.permute.xlu0 0
    %1312 = vperm.xlu0 %1311, %v1197
    %v1313 = vpop.permute.xlu0 %1312
    %v1315 = vmul.f32 %v410, %v1238
    %v1316 = vmul.f32 %v413, %v1243
    %v1317 = vmul.f32 %v418, %v1248
    %v1318 = vmul.f32 %v421, %v1253
    %v1319 = vmul.f32 %v426, %v1258
    %v1320 = vmul.f32 %v429, %v1263
    %v1321 = vmul.f32 %v434, %v1268
    %v1322 = vmul.f32 %v437, %v1273
    %v1323 = vmul.f32 %v442, %v1278
    %v1324 = vmul.f32 %v445, %v1283
    %v1325 = vmul.f32 %v450, %v1288
    %v1326 = vmul.f32 %v453, %v1293
    %v1327 = vmul.f32 %v458, %v1298
    %v1328 = vmul.f32 %v461, %v1303
    %v1329 = vmul.f32 %v466, %v1308
    %v1330 = vmul.f32 %v469, %v1313
    %v1331 = vadd.f32 %v1315, %v1316
    %v1332 = vadd.f32 %v1331, %v1317
    %v1333 = vadd.f32 %v1332, %v1318
    %v1334 = vadd.f32 %v1333, %v1319
    %v1335 = vadd.f32 %v1334, %v1320
    %v1336 = vadd.f32 %v1335, %v1321
    %v1337 = vadd.f32 %v1336, %v1322
    %v1338 = vadd.f32 %v1337, %v1323
    %v1339 = vadd.f32 %v1338, %v1324
    %v1340 = vadd.f32 %v1339, %v1325
    %v1341 = vadd.f32 %v1340, %v1326
    %v1342 = vadd.f32 %v1341, %v1327
    %v1343 = vadd.f32 %v1342, %v1328
    %v1344 = vadd.f32 %v1343, %v1329
    %v1345 = vadd.f32 %v1344, %v1330
    %v1346 = vrot.slane %v1345, 4
    %v1347 = vadd.f32 %v1345, %v1346
    %v1348 = vrot.slane %v1347, 2
    %v1349 = vadd.f32 %v1347, %v1348
    %v1350 = vrot.slane %v1349, 1
    %v1351 = vadd.f32 %v1349, %v1350
    %v1352 = vsub.f32 %v1351, %v1234
    %v1353 = vadd.f32 %v1134, %v1135
    %v1354 = vadd.f32 %v1353, %v1136
    %v1355 = vadd.f32 %v1354, %v1137
    %v1356 = vadd.f32 %v1355, %v1138
    %v1357 = vadd.f32 %v1356, %v1139
    %v1358 = vadd.f32 %v1357, %v1140
    %v1359 = vadd.f32 %v1358, %v1141
    %v1360 = vadd.f32 %v1359, %v1142
    %v1361 = vadd.f32 %v1360, %v1143
    %v1362 = vadd.f32 %v1361, %v1144
    %v1363 = vadd.f32 %v1362, %v1145
    %v1364 = vadd.f32 %v1363, %v1146
    %v1365 = vadd.f32 %v1364, %v1147
    %v1366 = vadd.f32 %v1365, %v1148
    %v1367 = vadd.f32 %v1366, %v1149
    %v1368 = vrot.slane %v1367, 4
    %v1369 = vadd.f32 %v1367, %v1368
    %v1370 = vrot.slane %v1369, 2
    %v1371 = vadd.f32 %v1369, %v1370
    %v1372 = vrot.slane %v1371, 1
    %v1373 = vadd.f32 %v1371, %v1372
    %v1374 = vsub.f32 %v692, %v974
    %v1375 = vsub.f32 %v695, %v977
    %v1376 = vsub.f32 %v700, %v982
    %v1377 = vsub.f32 %v703, %v985
    %v1378 = vsub.f32 %v708, %v990
    %v1379 = vsub.f32 %v711, %v993
    %v1380 = vsub.f32 %v716, %v998
    %v1381 = vsub.f32 %v719, %v1001
    %v1382 = vsub.f32 %v724, %v1006
    %v1383 = vsub.f32 %v727, %v1009
    %v1384 = vsub.f32 %v732, %v1014
    %v1385 = vsub.f32 %v735, %v1017
    %v1386 = vsub.f32 %v740, %v1022
    %v1387 = vsub.f32 %v743, %v1025
    %v1388 = vsub.f32 %v748, %v1030
    %v1389 = vsub.f32 %v751, %v1033
    %v1390 = vand.u32 2147483647, %v1374
    %v1391 = vand.u32 2147483647, %v1375
    %v1392 = vand.u32 2147483647, %v1376
    %v1393 = vand.u32 2147483647, %v1377
    %v1394 = vand.u32 2147483647, %v1378
    %v1395 = vand.u32 2147483647, %v1379
    %v1396 = vand.u32 2147483647, %v1380
    %v1397 = vand.u32 2147483647, %v1381
    %v1398 = vand.u32 2147483647, %v1382
    %v1399 = vand.u32 2147483647, %v1383
    %v1400 = vand.u32 2147483647, %v1384
    %v1401 = vand.u32 2147483647, %v1385
    %v1402 = vand.u32 2147483647, %v1386
    %v1403 = vand.u32 2147483647, %v1387
    %v1404 = vand.u32 2147483647, %v1388
    %v1405 = vand.u32 2147483647, %v1389
    %v1406 = vld [vmem:[%s4] sm:$0xff]
    %v1407 = vld [vmem:[%s4 + $0x8] sm:$0xff]
    %v1408 = vld [vmem:[%s4 + $0x10] sm:$0xff]
    %v1409 = vld [vmem:[%s4 + $0x18] sm:$0xff]
    %v1410 = vld [vmem:[%s4 + $0x20] sm:$0xff]
    %v1411 = vld [vmem:[%s4 + $0x28] sm:$0xff]
    %v1412 = vld [vmem:[%s4 + $0x30] sm:$0xff]
    %v1413 = vld [vmem:[%s4 + $0x38] sm:$0xff]
    %v1414 = vld [vmem:[%s4 + $0x40] sm:$0xff]
    %v1415 = vld [vmem:[%s4 + $0x48] sm:$0xff]
    %v1416 = vld [vmem:[%s4 + $0x50] sm:$0xff]
    %v1417 = vld [vmem:[%s4 + $0x58] sm:$0xff]
    %v1418 = vld [vmem:[%s4 + $0x60] sm:$0xff]
    %v1419 = vld [vmem:[%s4 + $0x68] sm:$0xff]
    %v1420 = vld [vmem:[%s4 + $0x70] sm:$0xff]
    %v1421 = vld [vmem:[%s4 + $0x78] sm:$0xff]
    %v1422 = vadd.f32 %v1406, 0.0001
    %v1423 = vadd.f32 %v1407, 0.0001
    %v1424 = vadd.f32 %v1408, 0.0001
    %v1425 = vadd.f32 %v1409, 0.0001
    %v1426 = vadd.f32 %v1410, 0.0001
    %v1427 = vadd.f32 %v1411, 0.0001
    %v1428 = vadd.f32 %v1412, 0.0001
    %v1429 = vadd.f32 %v1413, 0.0001
    %v1430 = vadd.f32 %v1414, 0.0001
    %v1431 = vadd.f32 %v1415, 0.0001
    %v1432 = vadd.f32 %v1416, 0.0001
    %v1433 = vadd.f32 %v1417, 0.0001
    %v1434 = vadd.f32 %v1418, 0.0001
    %v1435 = vadd.f32 %v1419, 0.0001
    %v1436 = vadd.f32 %v1420, 0.0001
    %v1437 = vadd.f32 %v1421, 0.0001
    %v1438 = vrcp.pop %v1422
    %v1439 = vrcp.pop %v1423
    %v1440 = vrcp.pop %v1424
    %v1441 = vrcp.pop %v1425
    %v1442 = vrcp.pop %v1426
    %v1443 = vrcp.pop %v1427
    %v1444 = vrcp.pop %v1428
    %v1445 = vrcp.pop %v1429
    %v1446 = vrcp.pop %v1430
    %v1447 = vrcp.pop %v1431
    %v1448 = vrcp.pop %v1432
    %v1449 = vrcp.pop %v1433
    %v1450 = vrcp.pop %v1434
    %v1451 = vrcp.pop %v1435
    %v1452 = vrcp.pop %v1436
    %v1453 = vrcp.pop %v1437
    %1455 = vset.pattern.permute.xlu0 0
    %1456 = vperm.xlu0 %1455, %v1438
    %v1457 = vpop.permute.xlu0 %1456
    %1460 = vset.pattern.permute.xlu0 0
    %1461 = vperm.xlu0 %1460, %v1439
    %v1462 = vpop.permute.xlu0 %1461
    %1465 = vset.pattern.permute.xlu0 0
    %1466 = vperm.xlu0 %1465, %v1440
    %v1467 = vpop.permute.xlu0 %1466
    %1470 = vset.pattern.permute.xlu0 0
    %1471 = vperm.xlu0 %1470, %v1441
    %v1472 = vpop.permute.xlu0 %1471
    %1475 = vset.pattern.permute.xlu0 0
    %1476 = vperm.xlu0 %1475, %v1442
    %v1477 = vpop.permute.xlu0 %1476
    %1480 = vset.pattern.permute.xlu0 0
    %1481 = vperm.xlu0 %1480, %v1443
    %v1482 = vpop.permute.xlu0 %1481
    %1485 = vset.pattern.permute.xlu0 0
    %1486 = vperm.xlu0 %1485, %v1444
    %v1487 = vpop.permute.xlu0 %1486
    %1490 = vset.pattern.permute.xlu0 0
    %1491 = vperm.xlu0 %1490, %v1445
    %v1492 = vpop.permute.xlu0 %1491
    %1495 = vset.pattern.permute.xlu0 0
    %1496 = vperm.xlu0 %1495, %v1446
    %v1497 = vpop.permute.xlu0 %1496
    %1500 = vset.pattern.permute.xlu0 0
    %1501 = vperm.xlu0 %1500, %v1447
    %v1502 = vpop.permute.xlu0 %1501
    %1505 = vset.pattern.permute.xlu0 0
    %1506 = vperm.xlu0 %1505, %v1448
    %v1507 = vpop.permute.xlu0 %1506
    %1510 = vset.pattern.permute.xlu0 0
    %1511 = vperm.xlu0 %1510, %v1449
    %v1512 = vpop.permute.xlu0 %1511
    %1515 = vset.pattern.permute.xlu0 0
    %1516 = vperm.xlu0 %1515, %v1450
    %v1517 = vpop.permute.xlu0 %1516
    %1520 = vset.pattern.permute.xlu0 0
    %1521 = vperm.xlu0 %1520, %v1451
    %v1522 = vpop.permute.xlu0 %1521
    %1525 = vset.pattern.permute.xlu0 0
    %1526 = vperm.xlu0 %1525, %v1452
    %v1527 = vpop.permute.xlu0 %1526
    %1530 = vset.pattern.permute.xlu0 0
    %1531 = vperm.xlu0 %1530, %v1453
    %v1532 = vpop.permute.xlu0 %1531
    %v1534 = vmul.f32 %v1390, %v1457
    %v1535 = vmul.f32 %v1391, %v1462
    %v1536 = vmul.f32 %v1392, %v1467
    %v1537 = vmul.f32 %v1393, %v1472
    %v1538 = vmul.f32 %v1394, %v1477
    %v1539 = vmul.f32 %v1395, %v1482
    %v1540 = vmul.f32 %v1396, %v1487
    %v1541 = vmul.f32 %v1397, %v1492
    %v1542 = vmul.f32 %v1398, %v1497
    %v1543 = vmul.f32 %v1399, %v1502
    %v1544 = vmul.f32 %v1400, %v1507
    %v1545 = vmul.f32 %v1401, %v1512
    %v1546 = vmul.f32 %v1402, %v1517
    %v1547 = vmul.f32 %v1403, %v1522
    %v1548 = vmul.f32 %v1404, %v1527
    %v1549 = vmul.f32 %v1405, %v1532
    %vm1550 = vcmp.le.f32.partialorder %v1534, 1.0
    %vm1551 = vcmp.le.f32.partialorder %v1535, 1.0
    %vm1552 = vcmp.le.f32.partialorder %v1536, 1.0
    %vm1553 = vcmp.le.f32.partialorder %v1537, 1.0
    %vm1554 = vcmp.le.f32.partialorder %v1538, 1.0
    %vm1555 = vcmp.le.f32.partialorder %v1539, 1.0
    %vm1556 = vcmp.le.f32.partialorder %v1540, 1.0
    %vm1557 = vcmp.le.f32.partialorder %v1541, 1.0
    %vm1558 = vcmp.le.f32.partialorder %v1542, 1.0
    %vm1559 = vcmp.le.f32.partialorder %v1543, 1.0
    %vm1560 = vcmp.le.f32.partialorder %v1544, 1.0
    %vm1561 = vcmp.le.f32.partialorder %v1545, 1.0
    %vm1562 = vcmp.le.f32.partialorder %v1546, 1.0
    %vm1563 = vcmp.le.f32.partialorder %v1547, 1.0
    %vm1564 = vcmp.le.f32.partialorder %v1548, 1.0
    %vm1565 = vcmp.le.f32.partialorder %v1549, 1.0
    %v1566 = vmul.f32 %v1534, %v1534
    %v1567 = vmul.f32 %v1535, %v1535
    %v1568 = vmul.f32 %v1536, %v1536
    %v1569 = vmul.f32 %v1537, %v1537
    %v1570 = vmul.f32 %v1538, %v1538
    %v1571 = vmul.f32 %v1539, %v1539
    %v1572 = vmul.f32 %v1540, %v1540
    %v1573 = vmul.f32 %v1541, %v1541
    %v1574 = vmul.f32 %v1542, %v1542
    %v1575 = vmul.f32 %v1543, %v1543
    %v1576 = vmul.f32 %v1544, %v1544
    %v1577 = vmul.f32 %v1545, %v1545
    %v1578 = vmul.f32 %v1546, %v1546
    %v1579 = vmul.f32 %v1547, %v1547
    %v1580 = vmul.f32 %v1548, %v1548
    %v1581 = vmul.f32 %v1549, %v1549
    %v1582 = vsub.f32 %v1566, 1.0
    %v1583 = vsub.f32 %v1567, 1.0
    %v1584 = vsub.f32 %v1568, 1.0
    %v1585 = vsub.f32 %v1569, 1.0
    %v1586 = vsub.f32 %v1570, 1.0
    %v1587 = vsub.f32 %v1571, 1.0
    %v1588 = vsub.f32 %v1572, 1.0
    %v1589 = vsub.f32 %v1573, 1.0
    %v1590 = vsub.f32 %v1574, 1.0
    %v1591 = vsub.f32 %v1575, 1.0
    %v1592 = vsub.f32 %v1576, 1.0
    %v1593 = vsub.f32 %v1577, 1.0
    %v1594 = vsub.f32 %v1578, 1.0
    %v1595 = vsub.f32 %v1579, 1.0
    %v1596 = vsub.f32 %v1580, 1.0
    %v1597 = vsub.f32 %v1581, 1.0
    %v1598 = vsel %vm1550, 0.0, %v1582
    %v1599 = vsel %vm1551, 0.0, %v1583
    %v1600 = vsel %vm1552, 0.0, %v1584
    %v1601 = vsel %vm1553, 0.0, %v1585
    %v1602 = vsel %vm1554, 0.0, %v1586
    %v1603 = vsel %vm1555, 0.0, %v1587
    %v1604 = vsel %vm1556, 0.0, %v1588
    %v1605 = vsel %vm1557, 0.0, %v1589
    %v1606 = vsel %vm1558, 0.0, %v1590
    %v1607 = vsel %vm1559, 0.0, %v1591
    %v1608 = vsel %vm1560, 0.0, %v1592
    %v1609 = vsel %vm1561, 0.0, %v1593
    %v1610 = vsel %vm1562, 0.0, %v1594
    %v1611 = vsel %vm1563, 0.0, %v1595
    %v1612 = vsel %vm1564, 0.0, %v1596
    %v1613 = vsel %vm1565, 0.0, %v1597
    %v1614 = vadd.f32 %v1598, %v1599
    %v1615 = vadd.f32 %v1614, %v1600
    %v1616 = vadd.f32 %v1615, %v1601
    %v1617 = vadd.f32 %v1616, %v1602
    %v1618 = vadd.f32 %v1617, %v1603
    %v1619 = vadd.f32 %v1618, %v1604
    %v1620 = vadd.f32 %v1619, %v1605
    %v1621 = vadd.f32 %v1620, %v1606
    %v1622 = vadd.f32 %v1621, %v1607
    %v1623 = vadd.f32 %v1622, %v1608
    %v1624 = vadd.f32 %v1623, %v1609
    %v1625 = vadd.f32 %v1624, %v1610
    %v1626 = vadd.f32 %v1625, %v1611
    %v1627 = vadd.f32 %v1626, %v1612
    %v1628 = vadd.f32 %v1627, %v1613
    %v1629 = vrot.slane %v1628, 4
    %v1630 = vadd.f32 %v1628, %v1629
    %v1631 = vrot.slane %v1630, 2
    %v1632 = vadd.f32 %v1630, %v1631
    %v1633 = vrot.slane %v1632, 1
    %v1634 = vadd.f32 %v1632, %v1633
    %vm1635 = vcmask 1040384
    %v1636 = vsel %vm1635, %v1234, %v1352
    %vm1637 = vcmask 1041408
    %v1638 = vsel %vm1637, %v1636, %v1373
    %vm1639 = vcmask 1042432
    %v1640 = vsel %vm1639, %v1638, %v1634
    %vm1641 = vcmask 1043456
    %v1642 = vsel %vm1641, %v1640, 0.0
    %1643 = vst [vmem:[#allocation5] sm:$0xff] %v1642
    // Predicated region
    $region42: #{tpu_custom_call.1} parent=1 // pred_check
      _
    $region43: #{tpu_custom_call.1} parent=1 // pred_check_branch
      %1645 = sbr.rel (0) target = $region45
    $region44: #{tpu_custom_call.1} parent=1 // pred_region
      %s1647 = ssub.s32 128, 128
      %1648 = vsyncadd [#allocation4], %s1647
      %s1650 = sshll.u32 [#allocation5], 4
      %s1651 = int_to_ptr.vmem [resolvable:$true] %s1650
      %1653 = dma.vmem_to_hbm [thread:$0]  %s1651, 128, %s9, [#allocation4]
    $region45: #{tpu_custom_call.1} parent=1 // pred_fallthru
      _
    // Predicated region
    $region46: #{tpu_custom_call.1} parent=1 // pred_check
      _
    $region47: #{tpu_custom_call.1} parent=1 // pred_check_branch
      %1655 = sbr.rel (0) target = $region49
    $region48: #{tpu_custom_call.1} parent=1 // pred_region
      %1656 = dma.done [#allocation4], 128
    $region49: #{tpu_custom_call.1} parent=1 // pred_fallthru
      _
    %1657 = vsyncpa [#allocation3], 1
    %1658 = vsyncpa [#allocation4], 1

</llo_original>
